<compile_context>
chip_gen: v6e
topology: v6e:2x2x1
jax: 0.10.0
libtpu: 0.0.40
codegen_flags: <defaults>
</compile_context>

<pallas_src>
import functools

import jax
import jax.numpy as jnp
from jax.experimental import pallas as pl
from jax.experimental.pallas import tpu as pltpu

DIMS = 10          # input feature dim
HIDDEN = 300       # hidden width of fc1/fc2/fc3
OUT_DIMS = 10      # output dim of fc4
BN_EPS = 1e-5
L2_EPS = 1e-12     # F.normalize eps

# Lane-aligned (padded) sizes used for the MXU operands.
D_PAD = 128        # K of fc1: 10  -> 128
H_PAD = 384        # 300 -> 384 (3 * 128)
O_PAD = 128        # N of fc4: 10  -> 128 (only the first 10 cols are stored)


# ----------------------------------------------------------------------------
# Kernel
# ----------------------------------------------------------------------------
def fullcon_kernel(x_ref,
                   w1_ref, b1_ref,
                   w2_ref, b2_ref,
                   w3_ref, b3_ref,
                   w4_ref, b4_ref,
                   o_ref,
                   xpad_ref):
    # ---- F.normalize(x, p=2, dim=1) in f32 on the true 10 feature columns ----
    # x / max(||x||, eps) == x * rsqrt(max(sum(x^2), eps^2))  (rsqrt -> EUP)
    x = x_ref[...].astype(jnp.float32)                       # (tb, DIMS)
    sumsq = jnp.sum(x * x, axis=1, keepdims=True)            # (tb, 1)
    xn = x * jax.lax.rsqrt(jnp.maximum(sumsq, L2_EPS * L2_EPS))

    # ---- Zero-pad K (10 -> 128) in VMEM; HBM tile stays unpadded ----
    # Re-zeroed every step so the result is independent of which core runs
    # which grid step ("parallel" axis / megacore safe).
    xpad_ref[...] = jnp.zeros_like(xpad_ref)
    xpad_ref[:, :DIMS] = xn
    xk = xpad_ref[...]

    # fc1 (BN folded in) -> ReLU ; dropout is identity in eval mode
    h = jnp.dot(xk.astype(jnp.bfloat16), w1_ref[...],
                preferred_element_type=jnp.float32) + b1_ref[...]
    h = jnp.maximum(h, 0.0)

    # fc2 (BN folded in) -> ReLU
    h = jnp.dot(h.astype(jnp.bfloat16), w2_ref[...],
                preferred_element_type=jnp.float32) + b2_ref[...]
    h = jnp.maximum(h, 0.0)

    # fc3 (BN folded in) -> ReLU
    h = jnp.dot(h.astype(jnp.bfloat16), w3_ref[...],
                preferred_element_type=jnp.float32) + b3_ref[...]
    h = jnp.maximum(h, 0.0)

    # fc4 (no BN / no activation); only the real 10 output columns are stored.
    out = jnp.dot(h.astype(jnp.bfloat16), w4_ref[...],
                  preferred_element_type=jnp.float32) + b4_ref[...]
    o_ref[...] = out[:, :OUT_DIMS].astype(o_ref.dtype)


# ----------------------------------------------------------------------------
# Parameter construction / packing
# ----------------------------------------------------------------------------
def init_raw_params(key, dims=DIMS, hidden=HIDDEN, out_dims=OUT_DIMS):
    """PyTorch-style init.  Linear weights are stored as [in, out] (W.T relative
    to nn.Linear); BatchNorm uses default gamma=1, beta=0, running stats 0/1."""
    def linear(k, fan_in, fan_out):
        kw, kb = jax.random.split(k)
        bound = 1.0 / jnp.sqrt(float(fan_in))
        w = jax.random.uniform(kw, (fan_in, fan_out), jnp.float32, -bound, bound)
        b = jax.random.uniform(kb, (fan_out,), jnp.float32, -bound, bound)
        return w, b

    def bn(num_features):
        gamma = jnp.ones((num_features,), jnp.float32)
        beta = jnp.zeros((num_features,), jnp.float32)
        running_mean = jnp.zeros((num_features,), jnp.float32)
        running_var = jnp.ones((num_features,), jnp.float32)
        return (gamma, beta, running_mean, running_var)

    k1, k2, k3, k4 = jax.random.split(key, 4)
    w1, b1 = linear(k1, dims, hidden)
    w2, b2 = linear(k2, hidden, hidden)
    w3, b3 = linear(k3, hidden, hidden)
    w4, b4 = linear(k4, hidden, out_dims)
    return (w1, b1, bn(hidden), w2, b2, bn(hidden), w3, b3, bn(hidden), w4, b4)


def _pad2d(a, rows, cols):
    return jnp.pad(a, ((0, rows - a.shape[0]), (0, cols - a.shape[1])))


def pack_params(raw):
    """Fold eval-mode BN into the Linear weights, zero-pad to lane-aligned
    shapes, and cast weights to bf16 (biases stay f32)."""
    (w1, b1, bn1, w2, b2, bn2, w3, b3, bn3, w4, b4) = raw

    def fold(w, b, stats):
        gamma, beta, mean, var = stats
        s = gamma / jnp.sqrt(var + BN_EPS)
        t = beta - mean * s
        return w * s[None, :], b * s + t

    w1e, b1e = fold(w1, b1, bn1)
    w2e, b2e = fold(w2, b2, bn2)
    w3e, b3e = fold(w3, b3, bn3)
    w4e, b4e = w4, b4

    w1p = _pad2d(w1e, D_PAD, H_PAD).astype(jnp.bfloat16)
    w2p = _pad2d(w2e, H_PAD, H_PAD).astype(jnp.bfloat16)
    w3p = _pad2d(w3e, H_PAD, H_PAD).astype(jnp.bfloat16)
    w4p = _pad2d(w4e, H_PAD, O_PAD).astype(jnp.bfloat16)
    b1p = _pad2d(b1e[None, :], 1, H_PAD)
    b2p = _pad2d(b2e[None, :], 1, H_PAD)
    b3p = _pad2d(b3e[None, :], 1, H_PAD)
    b4p = _pad2d(b4e[None, :], 1, O_PAD)
    return (w1p, b1p, w2p, b2p, w3p, b3p, w4p, b4p)


# ----------------------------------------------------------------------------
# Batch-tile selection
# ----------------------------------------------------------------------------
def _choose_tb(B, cap=2048):
    """Pick a batch tile: large (amortizes ~0.35us/step), multiple of 8,
    <= cap (fits v7x's 64 MiB VMEM comfortably), prefers >=2 grid steps so the
    'parallel' axis shards across v7x's two TensorCores.  Never returns B for
    huge batches; the wrapper row-pads B up to a tile multiple instead."""
    cands = [c for c in (2048, 1024, 512, 256, 128, 64, 32, 16, 8) if c <= cap]
    # Prefer a large tile that evenly divides B into >= 2 grid steps.
    for c in cands:
        if c >= 256 and B % c == 0 and B // c >= 2:
            return c
    # Small batch: one (row-padded) tile covering everything.
    if B <= cands[0]:
        for c in reversed(cands):       # smallest candidate first
            if c >= B:
                return c
    # Large batch with awkward divisors: biggest tile, wrapper pads rows.
    return cands[0]


# ----------------------------------------------------------------------------
# Forward wrapper
# ----------------------------------------------------------------------------
@functools.partial(jax.jit, static_argnames=("tb",))
def fullcon_forward(x, packed, tb=None):
    B, D = x.shape
    assert D == DIMS
    if tb is None:
        tb = _choose_tb(B)

    # Row-pad the batch (zero rows are harmless and sliced off) if needed.
    Bp = ((B + tb - 1) // tb) * tb
    xi = x if Bp == B else jnp.pad(x, ((0, Bp - B), (0, 0)))

    (w1, b1, w2, b2, w3, b3, w4, b4) = packed

    def full2d(a):
        # Whole (small) constant array every step; index map is constant so
        # Pallas does not re-copy it across grid steps.
        return pl.BlockSpec(a.shape, lambda i: (0, 0))

    grid_spec = pltpu.PrefetchScalarGridSpec(
        num_scalar_prefetch=0,
        grid=(Bp // tb,),
        in_specs=[
            # x tile: full (unpadded) feature dim -> contiguous 40 B/row DMA.
            pl.BlockSpec((tb, DIMS), lambda i: (i, 0)),
            full2d(w1), full2d(b1),
            full2d(w2), full2d(b2),
            full2d(w3), full2d(b3),
            full2d(w4), full2d(b4),
        ],
        # Real output width: contiguous HBM writeback, no post-kernel slice.
        out_specs=pl.BlockSpec((tb, OUT_DIMS), lambda i: (i, 0)),
        scratch_shapes=[pltpu.VMEM((tb, D_PAD), jnp.float32)],  # K-padded x
    )

    out = pl.pallas_call(
        fullcon_kernel,
        out_shape=jax.ShapeDtypeStruct((Bp, OUT_DIMS), jnp.float32),
        grid_spec=grid_spec,
        compiler_params=pltpu.CompilerParams(
            dimension_semantics=("parallel",),
            vmem_limit_bytes=32 * 1024 * 1024),
    )(xi, w1, b1, w2, b2, w3, b3, w4, b4)

    return out if Bp == B else out[:B]


# ----------------------------------------------------------------------------
# References
# ----------------------------------------------------------------------------
def reference_packed(x, packed):
    """Same math as the kernel (bf16 weights, folded BN, padded lanes)."""
    (w1, b1, w2, b2, w3, b3, w4, b4) = packed
    sumsq = jnp.sum(x * x, axis=1, keepdims=True)
    h = x * jax.lax.rsqrt(jnp.maximum(sumsq, L2_EPS * L2_EPS))
    h = jnp.pad(h.astype(jnp.float32), ((0, 0), (0, D_PAD - x.shape[1])))
    h = jnp.maximum(jnp.dot(h.astype(jnp.bfloat16), w1,
                            preferred_element_type=jnp.float32) + b1, 0.0)
    h = jnp.maximum(jnp.dot(h.astype(jnp.bfloat16), w2,
                            preferred_element_type=jnp.float32) + b2, 0.0)
    h = jnp.maximum(jnp.dot(h.astype(jnp.bfloat16), w3,
                            preferred_element_type=jnp.float32) + b3, 0.0)
    out = jnp.dot(h.astype(jnp.bfloat16), w4,
                  preferred_element_type=jnp.float32) + b4
    return out[:, :OUT_DIMS]


def reference_f32(x, raw):
    """Pure-f32 eval-mode reference of the original PyTorch module."""
    (w1, b1, bn1, w2, b2, bn2, w3, b3, bn3, w4, b4) = raw

    def bn(h, stats):
        gamma, beta, mean, var = stats
        return (h - mean) / jnp.sqrt(var + BN_EPS) * gamma + beta

    nrm = jnp.sqrt(jnp.sum(x * x, axis=1, keepdims=True))
    h = x / jnp.maximum(nrm, L2_EPS)
    h = jnp.maximum(bn(h @ w1 + b1, bn1), 0.0)
    h = jnp.maximum(bn(h @ w2 + b2, bn2), 0.0)
    h = jnp.maximum(bn(h @ w3 + b3, bn3), 0.0)
    return h @ w4 + b4


# ----------------------------------------------------------------------------
if __name__ == "__main__":
    key = jax.random.PRNGKey(0)
    kx, kp = jax.random.split(key)

    B = 8
    x = jax.random.normal(kx, (B, DIMS), jnp.float32)

    raw = init_raw_params(kp)
    packed = pack_params(raw)

    out = fullcon_forward(x, packed)
    out = jax.block_until_ready(out)

    assert out.shape == (B, OUT_DIMS)

    # Tight check against a reference that uses the exact same bf16/folded math.
    ref_bf16 = reference_packed(x, packed)
    assert jnp.allclose(out, ref_bf16, atol=1e-3, rtol=1e-3)

    # Loose check against the full-precision eval-mode module forward
    # (bf16 weight quantization bounds the difference).
    ref_f32 = reference_f32(x, raw)
    assert jnp.allclose(out, ref_f32, atol=5e-2, rtol=5e-2)

    # TODO(synk): training-mode batch-stat BatchNorm and stochastic Dropout are
    # not modeled; this kernel implements the deterministic eval-mode forward.
    print("KERNEL_OK")
</pallas_src>

<mosaic_0001>
module attributes {stable_mosaic.version = 11 : i64} {
  func.func @fullcon_kernel(%arg0: i32, %arg1: memref<8x10xf32, #tpu.memory_space<vmem>>, %arg2: memref<128x384xbf16, #tpu.memory_space<vmem>>, %arg3: memref<1x384xf32, #tpu.memory_space<vmem>>, %arg4: memref<384x384xbf16, #tpu.memory_space<vmem>>, %arg5: memref<1x384xf32, #tpu.memory_space<vmem>>, %arg6: memref<384x384xbf16, #tpu.memory_space<vmem>>, %arg7: memref<1x384xf32, #tpu.memory_space<vmem>>, %arg8: memref<384x128xbf16, #tpu.memory_space<vmem>>, %arg9: memref<1x128xf32, #tpu.memory_space<vmem>>, %arg10: memref<8x10xf32, #tpu.memory_space<vmem>>, %arg11: memref<8x128xf32, #tpu.memory_space<vmem>>) attributes {dimension_semantics = [#tpu.dimension_semantics<parallel>], iteration_bounds = array<i64: 1>, scalar_prefetch = 0 : i64, scratch_operands = 1 : i64, tpu.core_type = #tpu.core_type<tc>, window_params = [{transform_indices = @transform_0, window_bounds = array<i64: 8, 10>}, {pipeline_mode = #tpu.pipeline_mode<synchronous>, transform_indices = @transform_1, window_bounds = array<i64: 128, 384>}, {pipeline_mode = #tpu.pipeline_mode<synchronous>, transform_indices = @transform_2, window_bounds = array<i64: 1, 384>}, {pipeline_mode = #tpu.pipeline_mode<synchronous>, transform_indices = @transform_3, window_bounds = array<i64: 384, 384>}, {pipeline_mode = #tpu.pipeline_mode<synchronous>, transform_indices = @transform_4, window_bounds = array<i64: 1, 384>}, {pipeline_mode = #tpu.pipeline_mode<synchronous>, transform_indices = @transform_5, window_bounds = array<i64: 384, 384>}, {pipeline_mode = #tpu.pipeline_mode<synchronous>, transform_indices = @transform_6, window_bounds = array<i64: 1, 384>}, {pipeline_mode = #tpu.pipeline_mode<synchronous>, transform_indices = @transform_7, window_bounds = array<i64: 384, 128>}, {pipeline_mode = #tpu.pipeline_mode<synchronous>, transform_indices = @transform_8, window_bounds = array<i64: 1, 128>}, {transform_indices = @transform_9, window_bounds = array<i64: 8, 10>}]} {
    %c0 = arith.constant 0 : index
    %c0_0 = arith.constant 0 : index
    %0 = vector.load %arg1[%c0, %c0_0] : memref<8x10xf32, #tpu.memory_space<vmem>>, vector<8x10xf32>
    %1 = arith.mulf %0, %0 : vector<8x10xf32>
    %cst = arith.constant dense<0.000000e+00> : vector<8xf32>
    %2 = vector.multi_reduction <add>, %1, %cst [1] : vector<8x10xf32> to vector<8xf32>
    %3 = vector.shape_cast %2 : vector<8xf32> to vector<8x1xf32>
    %cst_1 = arith.constant 1.000000e-24 : f32
    %4 = vector.broadcast %cst_1 : f32 to vector<8x1xf32>
    %5 = arith.maximumf %3, %4 : vector<8x1xf32>
    %6 = math.rsqrt %5 : vector<8x1xf32>
    %7 = vector.broadcast %6 : vector<8x1xf32> to vector<8x10xf32>
    %8 = arith.mulf %0, %7 : vector<8x10xf32>
    %cst_2 = arith.constant 0.000000e+00 : f32
    %9 = vector.broadcast %cst_2 : f32 to vector<8x128xf32>
    %c0_3 = arith.constant 0 : index
    %c0_4 = arith.constant 0 : index
    %10 = vector.load %arg11[%c0_3, %c0_4] : memref<8x128xf32, #tpu.memory_space<vmem>>, vector<8x128xf32>
    tpu.vector_store %arg11[%c0_3, %c0_4], %9 {strides = array<i32>} : memref<8x128xf32, #tpu.memory_space<vmem>>, vector<8x128xf32>,
    %c0_5 = arith.constant 0 : index
    %c0_6 = arith.constant 0 : index
    %11 = vector.load %arg11[%c0_5, %c0_6] : memref<8x128xf32, #tpu.memory_space<vmem>>, vector<8x10xf32>
    tpu.vector_store %arg11[%c0_5, %c0_6], %8 {strides = array<i32>} : memref<8x128xf32, #tpu.memory_space<vmem>>, vector<8x10xf32>,
    %c0_7 = arith.constant 0 : index
    %c0_8 = arith.constant 0 : index
    %12 = vector.load %arg11[%c0_7, %c0_8] : memref<8x128xf32, #tpu.memory_space<vmem>>, vector<8x128xf32>
    %13 = arith.truncf %12 : vector<8x128xf32> to vector<8x128xbf16>
    %c0_9 = arith.constant 0 : index
    %c0_10 = arith.constant 0 : index
    %14 = vector.load %arg2[%c0_9, %c0_10] : memref<128x384xbf16, #tpu.memory_space<vmem>>, vector<128x384xbf16>
    %cst_11 = arith.constant dense<0.000000e+00> : vector<8x384xf32>
    %15 = tpu.matmul %13, %14, %cst_11 {dimension_numbers = #tpu.dot_dimension_numbers<[1], [0], [0], [1], [0, 0, 1, 1], [], []>} : vector<8x128xbf16>, vector<128x384xbf16>, vector<8x384xf32> -> vector<8x384xf32>
    %c0_12 = arith.constant 0 : index
    %c0_13 = arith.constant 0 : index
    %16 = vector.load %arg3[%c0_12, %c0_13] : memref<1x384xf32, #tpu.memory_space<vmem>>, vector<1x384xf32>
    %17 = vector.broadcast %16 : vector<1x384xf32> to vector<8x384xf32>
    %18 = arith.addf %15, %17 : vector<8x384xf32>
    %cst_14 = arith.constant 0.000000e+00 : f32
    %19 = vector.broadcast %cst_14 : f32 to vector<8x384xf32>
    %20 = arith.maximumf %18, %19 : vector<8x384xf32>
    %21 = arith.truncf %20 : vector<8x384xf32> to vector<8x384xbf16>
    %c0_15 = arith.constant 0 : index
    %c0_16 = arith.constant 0 : index
    %22 = vector.load %arg4[%c0_15, %c0_16] : memref<384x384xbf16, #tpu.memory_space<vmem>>, vector<384x384xbf16>
    %cst_17 = arith.constant dense<0.000000e+00> : vector<8x384xf32>
    %23 = tpu.matmul %21, %22, %cst_17 {dimension_numbers = #tpu.dot_dimension_numbers<[1], [0], [0], [1], [0, 0, 1, 1], [], []>} : vector<8x384xbf16>, vector<384x384xbf16>, vector<8x384xf32> -> vector<8x384xf32>
    %c0_18 = arith.constant 0 : index
    %c0_19 = arith.constant 0 : index
    %24 = vector.load %arg5[%c0_18, %c0_19] : memref<1x384xf32, #tpu.memory_space<vmem>>, vector<1x384xf32>
    %25 = vector.broadcast %24 : vector<1x384xf32> to vector<8x384xf32>
    %26 = arith.addf %23, %25 : vector<8x384xf32>
    %cst_20 = arith.constant 0.000000e+00 : f32
    %27 = vector.broadcast %cst_20 : f32 to vector<8x384xf32>
    %28 = arith.maximumf %26, %27 : vector<8x384xf32>
    %29 = arith.truncf %28 : vector<8x384xf32> to vector<8x384xbf16>
    %c0_21 = arith.constant 0 : index
    %c0_22 = arith.constant 0 : index
    %30 = vector.load %arg6[%c0_21, %c0_22] : memref<384x384xbf16, #tpu.memory_space<vmem>>, vector<384x384xbf16>
    %cst_23 = arith.constant dense<0.000000e+00> : vector<8x384xf32>
    %31 = tpu.matmul %29, %30, %cst_23 {dimension_numbers = #tpu.dot_dimension_numbers<[1], [0], [0], [1], [0, 0, 1, 1], [], []>} : vector<8x384xbf16>, vector<384x384xbf16>, vector<8x384xf32> -> vector<8x384xf32>
    %c0_24 = arith.constant 0 : index
    %c0_25 = arith.constant 0 : index
    %32 = vector.load %arg7[%c0_24, %c0_25] : memref<1x384xf32, #tpu.memory_space<vmem>>, vector<1x384xf32>
    %33 = vector.broadcast %32 : vector<1x384xf32> to vector<8x384xf32>
    %34 = arith.addf %31, %33 : vector<8x384xf32>
    %cst_26 = arith.constant 0.000000e+00 : f32
    %35 = vector.broadcast %cst_26 : f32 to vector<8x384xf32>
    %36 = arith.maximumf %34, %35 : vector<8x384xf32>
    %37 = arith.truncf %36 : vector<8x384xf32> to vector<8x384xbf16>
    %c0_27 = arith.constant 0 : index
    %c0_28 = arith.constant 0 : index
    %38 = vector.load %arg8[%c0_27, %c0_28] : memref<384x128xbf16, #tpu.memory_space<vmem>>, vector<384x128xbf16>
    %cst_29 = arith.constant dense<0.000000e+00> : vector<8x128xf32>
    %39 = tpu.matmul %37, %38, %cst_29 {dimension_numbers = #tpu.dot_dimension_numbers<[1], [0], [0], [1], [0, 0, 1, 1], [], []>} : vector<8x384xbf16>, vector<384x128xbf16>, vector<8x128xf32> -> vector<8x128xf32>
    %c0_30 = arith.constant 0 : index
    %c0_31 = arith.constant 0 : index
    %40 = vector.load %arg9[%c0_30, %c0_31] : memref<1x128xf32, #tpu.memory_space<vmem>>, vector<1x128xf32>
    %41 = vector.broadcast %40 : vector<1x128xf32> to vector<8x128xf32>
    %42 = arith.addf %39, %41 : vector<8x128xf32>
    %43 = vector.extract_strided_slice %42 {offsets = [0, 0], sizes = [8, 10], strides = [1, 1]} : vector<8x128xf32> to vector<8x10xf32>
    %c0_32 = arith.constant 0 : index
    %c0_33 = arith.constant 0 : index
    %44 = vector.load %arg10[%c0_32, %c0_33] : memref<8x10xf32, #tpu.memory_space<vmem>>, vector<8x10xf32>
    tpu.vector_store %arg10[%c0_32, %c0_33], %43 {strides = array<i32>} : memref<8x10xf32, #tpu.memory_space<vmem>>, vector<8x10xf32>,
    return
  }
  func.func @transform_0(%arg0: i32) -> (i32, i32) {
    %c0_i32 = arith.constant 0 : i32
    %c0_i32_0 = arith.constant 0 : i32
    return %arg0, %c0_i32 : i32, i32
  }
  func.func @transform_1(%arg0: i32) -> (i32, i32) {
    %c0_i32 = arith.constant 0 : i32
    %c0_i32_0 = arith.constant 0 : i32
    %c0_i32_1 = arith.constant 0 : i32
    return %c0_i32, %c0_i32_0 : i32, i32
  }
  func.func @transform_2(%arg0: i32) -> (i32, i32) {
    %c0_i32 = arith.constant 0 : i32
    %c0_i32_0 = arith.constant 0 : i32
    %c0_i32_1 = arith.constant 0 : i32
    return %c0_i32, %c0_i32_0 : i32, i32
  }
  func.func @transform_3(%arg0: i32) -> (i32, i32) {
    %c0_i32 = arith.constant 0 : i32
    %c0_i32_0 = arith.constant 0 : i32
    %c0_i32_1 = arith.constant 0 : i32
    return %c0_i32, %c0_i32_0 : i32, i32
  }
  func.func @transform_4(%arg0: i32) -> (i32, i32) {
    %c0_i32 = arith.constant 0 : i32
    %c0_i32_0 = arith.constant 0 : i32
    %c0_i32_1 = arith.constant 0 : i32
    return %c0_i32, %c0_i32_0 : i32, i32
  }
  func.func @transform_5(%arg0: i32) -> (i32, i32) {
    %c0_i32 = arith.constant 0 : i32
    %c0_i32_0 = arith.constant 0 : i32
    %c0_i32_1 = arith.constant 0 : i32
    return %c0_i32, %c0_i32_0 : i32, i32
  }
  func.func @transform_6(%arg0: i32) -> (i32, i32) {
    %c0_i32 = arith.constant 0 : i32
    %c0_i32_0 = arith.constant 0 : i32
    %c0_i32_1 = arith.constant 0 : i32
    return %c0_i32, %c0_i32_0 : i32, i32
  }
  func.func @transform_7(%arg0: i32) -> (i32, i32) {
    %c0_i32 = arith.constant 0 : i32
    %c0_i32_0 = arith.constant 0 : i32
    %c0_i32_1 = arith.constant 0 : i32
    return %c0_i32, %c0_i32_0 : i32, i32
  }
  func.func @transform_8(%arg0: i32) -> (i32, i32) {
    %c0_i32 = arith.constant 0 : i32
    %c0_i32_0 = arith.constant 0 : i32
    %c0_i32_1 = arith.constant 0 : i32
    return %c0_i32, %c0_i32_0 : i32, i32
  }
  func.func @transform_9(%arg0: i32) -> (i32, i32) {
    %c0_i32 = arith.constant 0 : i32
    %c0_i32_0 = arith.constant 0 : i32
    return %arg0, %c0_i32 : i32, i32
  }
}

</mosaic_0001>

<llo_original>
// kernel: fullcon_forward.1
$region0: #{fullcon_forward.1}
  #allocation0 [shape = 'u32[]', space=smem, size = 0x4, offset = 0x4, fixed_abs, tag = 'smem constant byte address 0x4 - core index']
  #allocation1 [shape = 'u32[144,128]{1,0:T(1,128)}', space=vmem, size = 0x12000, scoped, tag = 'internal scratch']
  #allocation2 [shape = 'f32[8,128]{1,0:T(8,128)}', space=vmem, size = 0x1000, scoped, tag = 'scratch operand']
  %s0 = inlined_call_operand.hbm [shape: f32[8,10], index: 0, kind: input, shape index: {}]
  %s1 = inlined_call_operand.hbm [shape: bf16[128,384], index: 1, kind: input, shape index: {}]
  %s2 = inlined_call_operand.vmem [shape: f32[1,384], index: 2, kind: input, shape index: {}]
  %s3 = inlined_call_operand.hbm [shape: bf16[384,384], index: 3, kind: input, shape index: {}]
  %s4 = inlined_call_operand.vmem [shape: f32[1,384], index: 4, kind: input, shape index: {}]
  %s5 = inlined_call_operand.hbm [shape: bf16[384,384], index: 5, kind: input, shape index: {}]
  %s6 = inlined_call_operand.vmem [shape: f32[1,384], index: 6, kind: input, shape index: {}]
  %s7 = inlined_call_operand.hbm [shape: bf16[384,128], index: 7, kind: input, shape index: {}]
  %s8 = inlined_call_operand.vmem [shape: f32[1,128], index: 8, kind: input, shape index: {}]
  %s9 = inlined_call_operand.hbm [shape: f32[8,10], index: 9, kind: output, shape index: {}]
  %s10 = sld [smem:[#allocation0]]
  $region66: #{fullcon_forward.1} parent=0
    _
  %s12 = ssub.s32 1, %s10
  %s13 = scalar_select 0, %s12, %s10
  $region1: #{fullcon_forward.1} parent=0
    #allocation3 [shape = 'u8[4096]{0}', space=vmem, size = 0x1000, scoped, tag = 'input window, operand 0, single buffered']
    #allocation4 [shape = 's32[1]{0}', space=sflag, size = 0x4, scoped, tag = 'scoped memory for fullcon_forward.1']
    #allocation5 [shape = 's32[1]{0}', space=sflag, size = 0x4, scoped, tag = 'scoped memory for fullcon_forward.1']
    #allocation6 [shape = 'u8[98304]{0}', space=vmem, size = 0x18000, scoped, tag = 'input window, operand 1, single buffered']
    #allocation7 [shape = 's32[1]{0}', space=sflag, size = 0x4, scoped, tag = 'scoped memory for fullcon_forward.1']
    #allocation8 [shape = 'u8[294912]{0}', space=vmem, size = 0x48000, scoped, tag = 'input window, operand 3, single buffered']
    #allocation9 [shape = 'u8[294912]{0}', space=vmem, size = 0x48000, scoped, tag = 'input window, operand 5, single buffered']
    #allocation10 [shape = 's32[1]{0}', space=sflag, size = 0x4, scoped, tag = 'scoped memory for fullcon_forward.1']
    #allocation11 [shape = 'u8[98304]{0}', space=vmem, size = 0x18000, scoped, tag = 'input window, operand 7, single buffered']
    #allocation12 [shape = 'u8[4096]{0}', space=vmem, size = 0x1000, scoped, tag = 'output window, operand 0, single buffered']
    %14 = vsyncpa [#allocation4], 0
    %15 = vsyncpa [#allocation7], 0
    %16 = vsyncpa [#allocation10], 0
    %17 = vsyncpa [#allocation5], 0
    // Predicated region
    $region2: #{fullcon_forward.1} parent=1 // pred_check
      _
    $region3: #{fullcon_forward.1} parent=1 // pred_check_branch
      %19 = sbr.rel (0) target = $region5
    $region4: #{fullcon_forward.1} parent=1 // pred_region
      %s21 = ssub.s32 128, 128
      %22 = vsyncadd [#allocation4], %s21
      %s24 = sshll.u32 [#allocation3], 4
      %s25 = int_to_ptr.vmem [resolvable:$true] %s24
      %27 = dma.hbm_to_vmem [thread:$0]  %s0, 128, %s25, [#allocation4]
    $region5: #{fullcon_forward.1} parent=1 // pred_fallthru
      _
    // Predicated region
    $region6: #{fullcon_forward.1} parent=1 // pred_check
      _
    $region7: #{fullcon_forward.1} parent=1 // pred_check_branch
      %29 = sbr.rel (0) target = $region9
    $region8: #{fullcon_forward.1} parent=1 // pred_region
      %s31 = ssub.s32 3072, 3072
      %32 = vsyncadd [#allocation7], %s31
      %s33 = sshll.u32 [#allocation6], 4
      %s34 = int_to_ptr.vmem [resolvable:$true] %s33
      %39 = dma.hbm_to_vmem [thread:$0]  %s1, 3072, %s34, [#allocation7], 192, 192, 12
    $region9: #{fullcon_forward.1} parent=1 // pred_fallthru
      _
    // Predicated region
    $region10: #{fullcon_forward.1} parent=1 // pred_check
      _
    $region11: #{fullcon_forward.1} parent=1 // pred_check_branch
      %41 = sbr.rel (0) target = $region13
    $region12: #{fullcon_forward.1} parent=1 // pred_region
      _
    $region13: #{fullcon_forward.1} parent=1 // pred_fallthru
      _
    // Predicated region
    $region14: #{fullcon_forward.1} parent=1 // pred_check
      _
    $region15: #{fullcon_forward.1} parent=1 // pred_check_branch
      %43 = sbr.rel (0) target = $region17
    $region16: #{fullcon_forward.1} parent=1 // pred_region
      %s45 = ssub.s32 9216, 9216
      %46 = vsyncadd [#allocation7], %s45
      %s47 = sshll.u32 [#allocation8], 4
      %s48 = int_to_ptr.vmem [resolvable:$true] %s47
      %53 = dma.hbm_to_vmem [thread:$0]  %s3, 9216, %s48, [#allocation7], 192, 192, 12
    $region17: #{fullcon_forward.1} parent=1 // pred_fallthru
      _
    // Predicated region
    $region18: #{fullcon_forward.1} parent=1 // pred_check
      _
    $region19: #{fullcon_forward.1} parent=1 // pred_check_branch
      %55 = sbr.rel (0) target = $region21
    $region20: #{fullcon_forward.1} parent=1 // pred_region
      _
    $region21: #{fullcon_forward.1} parent=1 // pred_fallthru
      _
    // Predicated region
    $region22: #{fullcon_forward.1} parent=1 // pred_check
      _
    $region23: #{fullcon_forward.1} parent=1 // pred_check_branch
      %57 = sbr.rel (0) target = $region25
    $region24: #{fullcon_forward.1} parent=1 // pred_region
      %s59 = ssub.s32 9216, 9216
      %60 = vsyncadd [#allocation10], %s59
      %s61 = sshll.u32 [#allocation9], 4
      %s62 = int_to_ptr.vmem [resolvable:$true] %s61
      %67 = dma.hbm_to_vmem [thread:$0]  %s5, 9216, %s62, [#allocation10], 192, 192, 12
    $region25: #{fullcon_forward.1} parent=1 // pred_fallthru
      _
    // Predicated region
    $region26: #{fullcon_forward.1} parent=1 // pred_check
      _
    $region27: #{fullcon_forward.1} parent=1 // pred_check_branch
      %69 = sbr.rel (0) target = $region29
    $region28: #{fullcon_forward.1} parent=1 // pred_region
      _
    $region29: #{fullcon_forward.1} parent=1 // pred_fallthru
      _
    // Predicated region
    $region30: #{fullcon_forward.1} parent=1 // pred_check
      _
    $region31: #{fullcon_forward.1} parent=1 // pred_check_branch
      %71 = sbr.rel (0) target = $region33
    $region32: #{fullcon_forward.1} parent=1 // pred_region
      %s73 = ssub.s32 3072, 3072
      %74 = vsyncadd [#allocation10], %s73
      %s75 = sshll.u32 [#allocation11], 4
      %s76 = int_to_ptr.vmem [resolvable:$true] %s75
      %81 = dma.hbm_to_vmem [thread:$0]  %s7, 3072, %s76, [#allocation10], 64, 64, 4
    $region33: #{fullcon_forward.1} parent=1 // pred_fallthru
      _
    // Predicated region
    $region34: #{fullcon_forward.1} parent=1 // pred_check
      _
    $region35: #{fullcon_forward.1} parent=1 // pred_check_branch
      %83 = sbr.rel (0) target = $region37
    $region36: #{fullcon_forward.1} parent=1 // pred_region
      _
    $region37: #{fullcon_forward.1} parent=1 // pred_fallthru
      _
    // Predicated region
    $region38: #{fullcon_forward.1} parent=1 // pred_check
      _
    $region39: #{fullcon_forward.1} parent=1 // pred_check_branch
      %85 = sbr.rel (0) target = $region41
    $region40: #{fullcon_forward.1} parent=1 // pred_region
      %86 = dma.done [#allocation4], 128
    $region41: #{fullcon_forward.1} parent=1 // pred_fallthru
      _
    // Predicated region
    $region42: #{fullcon_forward.1} parent=1 // pred_check
      _
    $region43: #{fullcon_forward.1} parent=1 // pred_check_branch
      %88 = sbr.rel (0) target = $region45
    $region44: #{fullcon_forward.1} parent=1 // pred_region
      %89 = dma.done [#allocation7], 3072
    $region45: #{fullcon_forward.1} parent=1 // pred_fallthru
      _
    // Predicated region
    $region46: #{fullcon_forward.1} parent=1 // pred_check
      _
    $region47: #{fullcon_forward.1} parent=1 // pred_check_branch
      %91 = sbr.rel (0) target = $region49
    $region48: #{fullcon_forward.1} parent=1 // pred_region
      %92 = dma.done [#allocation7], 9216
    $region49: #{fullcon_forward.1} parent=1 // pred_fallthru
      _
    // Predicated region
    $region50: #{fullcon_forward.1} parent=1 // pred_check
      _
    $region51: #{fullcon_forward.1} parent=1 // pred_check_branch
      %94 = sbr.rel (0) target = $region53
    $region52: #{fullcon_forward.1} parent=1 // pred_region
      %95 = dma.done [#allocation10], 9216
    $region53: #{fullcon_forward.1} parent=1 // pred_fallthru
      _
    // Predicated region
    $region54: #{fullcon_forward.1} parent=1 // pred_check
      _
    $region55: #{fullcon_forward.1} parent=1 // pred_check_branch
      %97 = sbr.rel (0) target = $region57
    $region56: #{fullcon_forward.1} parent=1 // pred_region
      %98 = dma.done [#allocation10], 3072
    $region57: #{fullcon_forward.1} parent=1 // pred_fallthru
      _
    %v100 = vld [vmem:[#allocation3] sm:$0xff]
    %v101 = vmul.f32 %v100, %v100
    %vm102 = vcmask 80896
    %v103 = vsel %vm102, %v101, 0.0
    %104 = vadd.xlane.f32.xlu0 %v103
    %v105 = vpop.xlane.xlu0 %104
    %v106 = vmax.f32 %v105, 1e-24
    %v107 = vrsqrt.pop %v106
    %v108 = vmul.f32 %v100, %v107
    %109 = vst [vmem:[#allocation2] sm:$0xff] 0.0
    %110 = vst.msk [vmem:[#allocation2] sm:$0xff] %vm102, %v108
    %v111 = vld [vmem:[#allocation2] sm:$0xff]
    %v112 = vpack.c.bf16 %v111, %v111
    %v113 = vld [vmem:[#allocation6] sm:$0xff]
    %v114 = vld [vmem:[#allocation6 + $0x8] sm:$0xf]
    %v115 = vld [vmem:[#allocation6 + $0xc] sm:$0xff]
    %v116 = vld [vmem:[#allocation6 + $0x14] sm:$0xf]
    %v117 = vld [vmem:[#allocation6 + $0x18] sm:$0xff]
    %v118 = vld [vmem:[#allocation6 + $0x20] sm:$0xf]
    %v119 = vld [vmem:[#allocation6 + $0x24] sm:$0xff]
    %v120 = vld [vmem:[#allocation6 + $0x2c] sm:$0xf]
    %v121 = vld [vmem:[#allocation6 + $0x30] sm:$0xff]
    %v122 = vld [vmem:[#allocation6 + $0x38] sm:$0xf]
    %v123 = vld [vmem:[#allocation6 + $0x3c] sm:$0xff]
    %v124 = vld [vmem:[#allocation6 + $0x44] sm:$0xf]
    %v125 = vld [vmem:[#allocation6 + $0x48] sm:$0xff]
    %v126 = vld [vmem:[#allocation6 + $0x50] sm:$0xf]
    %v127 = vld [vmem:[#allocation6 + $0x54] sm:$0xff]
    %v128 = vld [vmem:[#allocation6 + $0x5c] sm:$0xf]
    %v129 = vld [vmem:[#allocation6 + $0x60] sm:$0xff]
    %v130 = vld [vmem:[#allocation6 + $0x68] sm:$0xf]
    %v131 = vld [vmem:[#allocation6 + $0x6c] sm:$0xff]
    %v132 = vld [vmem:[#allocation6 + $0x74] sm:$0xf]
    %v133 = vld [vmem:[#allocation6 + $0x78] sm:$0xff]
    %v134 = vld [vmem:[#allocation6 + $0x80] sm:$0xf]
    %v135 = vld [vmem:[#allocation6 + $0x84] sm:$0xff]
    %v136 = vld [vmem:[#allocation6 + $0x8c] sm:$0xf]
    %v137 = vld [vmem:[#allocation6 + $0x90] sm:$0xff]
    %v138 = vld [vmem:[#allocation6 + $0x98] sm:$0xf]
    %v139 = vld [vmem:[#allocation6 + $0x9c] sm:$0xff]
    %v140 = vld [vmem:[#allocation6 + $0xa4] sm:$0xf]
    %v141 = vld [vmem:[#allocation6 + $0xa8] sm:$0xff]
    %v142 = vld [vmem:[#allocation6 + $0xb0] sm:$0xf]
    %v143 = vld [vmem:[#allocation6 + $0xb4] sm:$0xff]
    %v144 = vld [vmem:[#allocation6 + $0xbc] sm:$0xf]
    %v145 = vld [vmem:[%s2] sm:$0x7]
    %v147 = vlaneseq
    %v148 = vshrl.u32 %v147, 7
    %v149 = vsub.s32 0, %v148
    %v150 = vrot.slane %v145, %v149
    %v151 = vlaneseq
    %v152 = vshrl.u32 %v151, 7
    %v153 = vsub.s32 1, %v152
    %v154 = vrot.slane %v145, %v153
    %v155 = vlaneseq
    %v156 = vshrl.u32 %v155, 7
    %v157 = vsub.s32 2, %v156
    %v158 = vrot.slane %v145, %v157
    %v194 = vunpack.c.l.b16 %v113
    %v195 = vunpack.c.h.b16 %v113
    %v196 = vunpack.c.l.b16 %v114
    %v197 = vunpack.c.l.b16 %v115
    %v198 = vunpack.c.h.b16 %v115
    %v199 = vunpack.c.l.b16 %v116
    %v200 = vunpack.c.l.b16 %v117
    %v201 = vunpack.c.h.b16 %v117
    %v202 = vunpack.c.l.b16 %v118
    %v203 = vunpack.c.l.b16 %v119
    %v204 = vunpack.c.h.b16 %v119
    %v205 = vunpack.c.l.b16 %v120
    %v206 = vunpack.c.l.b16 %v121
    %v207 = vunpack.c.h.b16 %v121
    %v208 = vunpack.c.l.b16 %v122
    %v209 = vunpack.c.l.b16 %v123
    %v210 = vunpack.c.h.b16 %v123
    %v211 = vunpack.c.l.b16 %v124
    %v212 = vunpack.c.l.b16 %v125
    %v213 = vunpack.c.h.b16 %v125
    %v214 = vunpack.c.l.b16 %v126
    %v215 = vunpack.c.l.b16 %v127
    %v216 = vunpack.c.h.b16 %v127
    %v217 = vunpack.c.l.b16 %v128
    %v218 = vunpack.c.l.b16 %v129
    %v219 = vunpack.c.h.b16 %v129
    %v220 = vunpack.c.l.b16 %v130
    %v221 = vunpack.c.l.b16 %v131
    %v222 = vunpack.c.h.b16 %v131
    %v223 = vunpack.c.l.b16 %v132
    %v224 = vunpack.c.l.b16 %v133
    %v225 = vunpack.c.h.b16 %v133
    %v226 = vunpack.c.l.b16 %v134
    %v227 = vunpack.c.l.b16 %v135
    %v228 = vunpack.c.h.b16 %v135
    %v229 = vunpack.c.l.b16 %v136
    %v230 = vunpack.c.l.b16 %v137
    %v231 = vunpack.c.h.b16 %v137
    %v232 = vunpack.c.l.b16 %v138
    %v233 = vunpack.c.l.b16 %v139
    %v234 = vunpack.c.h.b16 %v139
    %v235 = vunpack.c.l.b16 %v140
    %v236 = vunpack.c.l.b16 %v141
    %v237 = vunpack.c.h.b16 %v141
    %v238 = vunpack.c.l.b16 %v142
    %v239 = vunpack.c.l.b16 %v143
    %v240 = vunpack.c.h.b16 %v143
    %v241 = vunpack.c.l.b16 %v144
    %v242 = vpack.c.b16 %v197, %v194
    %v243 = vpack.c.b16 %v198, %v195
    %v244 = vpack.c.b16 %v199, %v196
    %v245 = vpack.c.b16 %v203, %v200
    %v246 = vpack.c.b16 %v204, %v201
    %v247 = vpack.c.b16 %v205, %v202
    %v248 = vpack.c.b16 %v209, %v206
    %v249 = vpack.c.b16 %v210, %v207
    %v250 = vpack.c.b16 %v211, %v208
    %v251 = vpack.c.b16 %v215, %v212
    %v252 = vpack.c.b16 %v216, %v213
    %v253 = vpack.c.b16 %v217, %v214
    %v254 = vpack.c.b16 %v221, %v218
    %v255 = vpack.c.b16 %v222, %v219
    %v256 = vpack.c.b16 %v223, %v220
    %v257 = vpack.c.b16 %v227, %v224
    %v258 = vpack.c.b16 %v228, %v225
    %v259 = vpack.c.b16 %v229, %v226
    %v260 = vpack.c.b16 %v233, %v230
    %v261 = vpack.c.b16 %v234, %v231
    %v262 = vpack.c.b16 %v235, %v232
    %v263 = vpack.c.b16 %v239, %v236
    %v264 = vpack.c.b16 %v240, %v237
    %v265 = vpack.c.b16 %v241, %v238
    %290 = vmatprep.subr.bf16.mxu0 %v264
    %291 = vmatpush1.bf16.msra.mxu0 %v263
    %292 = vmatprep.subr.bf16.mxu0 %v261
    %293 = vmatpush1.bf16.msra.mxu0 %v260
    %294 = vmatprep.subr.bf16.mxu0 %v258
    %295 = vmatpush1.bf16.msra.mxu0 %v257
    %296 = vmatprep.subr.bf16.mxu0 %v255
    %297 = vmatpush1.bf16.msra.mxu0 %v254
    %298 = vmatprep.subr.bf16.mxu0 %v252
    %299 = vmatpush1.bf16.msra.mxu0 %v251
    %300 = vmatprep.subr.bf16.mxu0 %v249
    %301 = vmatpush1.bf16.msra.mxu0 %v248
    %302 = vmatprep.subr.bf16.mxu0 %v246
    %303 = vmatpush1.bf16.msra.mxu0 %v245
    %304 = vmatprep.subr.bf16.mxu0 %v243
    %305 = vmatpush1.bf16.msra.mxu0 %v242
    %306 = vmatprep.subr.bf16.mxu0 0
    %307 = vmatpush2.bf16.msra.mxu0 0
    %308 = vmatprep.subr.bf16.mxu0 0
    %309 = vmatpush2.bf16.msra.mxu0 0
    %310 = vmatprep.subr.bf16.mxu0 0
    %311 = vmatpush2.bf16.msra.mxu0 0
    %312 = vmatprep.subr.bf16.mxu0 0
    %313 = vmatpush2.bf16.msra.mxu0 0
    %314 = vmatprep.subr.bf16.mxu0 0
    %315 = vmatpush2.bf16.msra.mxu0 0
    %316 = vmatprep.subr.bf16.mxu0 0
    %317 = vmatpush2.bf16.msra.mxu0 0
    %318 = vmatprep.subr.bf16.mxu0 0
    %319 = vmatpush2.bf16.msra.mxu0 0
    %320 = vmatprep.subr.bf16.mxu0 0
    %321 = vmatpush2.bf16.msra.mxu0 0
    %322 = vmatprep.mubr.bf16.mxu0 0
    %323 = vmatmul.mubr.bf16.gmra.mxu0 %v112
    %v324 = vpop.f32.mrf.mxu0
    %v325 = vadd.f32 %v150, %v324
    %v326 = vpop.f32.mrf.mxu0
    %v327 = vadd.f32 %v154, %v326
    %v328 = vpop.f32.mrf.mxu0
    %v329 = vpop.f32.mrf.mxu0
    %330 = vdwg.mxu0
    %331 = vmatprep.subr.bf16.mxu0 0
    %332 = vmatpush1.bf16.msra.mxu0 %v265
    %333 = vmatprep.subr.bf16.mxu0 0
    %334 = vmatpush1.bf16.msra.mxu0 %v262
    %335 = vmatprep.subr.bf16.mxu0 0
    %336 = vmatpush1.bf16.msra.mxu0 %v259
    %337 = vmatprep.subr.bf16.mxu0 0
    %338 = vmatpush1.bf16.msra.mxu0 %v256
    %339 = vmatprep.subr.bf16.mxu0 0
    %340 = vmatpush1.bf16.msra.mxu0 %v253
    %341 = vmatprep.subr.bf16.mxu0 0
    %342 = vmatpush1.bf16.msra.mxu0 %v250
    %343 = vmatprep.subr.bf16.mxu0 0
    %344 = vmatpush1.bf16.msra.mxu0 %v247
    %345 = vmatprep.subr.bf16.mxu0 0
    %346 = vmatpush1.bf16.msra.mxu0 %v244
    %347 = vmatprep.subr.bf16.mxu0 0
    %348 = vmatpush2.bf16.msra.mxu0 0
    %349 = vmatprep.subr.bf16.mxu0 0
    %350 = vmatpush2.bf16.msra.mxu0 0
    %351 = vmatprep.subr.bf16.mxu0 0
    %352 = vmatpush2.bf16.msra.mxu0 0
    %353 = vmatprep.subr.bf16.mxu0 0
    %354 = vmatpush2.bf16.msra.mxu0 0
    %355 = vmatprep.subr.bf16.mxu0 0
    %356 = vmatpush2.bf16.msra.mxu0 0
    %357 = vmatprep.subr.bf16.mxu0 0
    %358 = vmatpush2.bf16.msra.mxu0 0
    %359 = vmatprep.subr.bf16.mxu0 0
    %360 = vmatpush2.bf16.msra.mxu0 0
    %361 = vmatprep.subr.bf16.mxu0 0
    %362 = vmatpush2.bf16.msra.mxu0 0
    %363 = vmatprep.mubr.bf16.mxu0 0
    %364 = vmatmul.mubr.bf16.gmra.mxu0 %v112
    %v365 = vpop.f32.mrf.mxu0
    %v366 = vadd.f32 %v158, %v365
    %v367 = vpop.f32.mrf.mxu0
    %v368 = vpop.f32.mrf.mxu0
    %v369 = vpop.f32.mrf.mxu0
    %370 = vdwg.mxu0
    %v371 = vmax.f32 %v325, 0.0
    %v372 = vmax.f32 %v327, 0.0
    %v373 = vmax.f32 %v366, 0.0
    %v374 = vpack.c.bf16 %v371, %v371
    %v375 = vpack.c.bf16 %v372, %v372
    %v376 = vpack.c.bf16 %v373, %v373
    %v377 = vld [vmem:[#allocation8] sm:$0xff]
    %v378 = vld [vmem:[#allocation8 + $0x8] sm:$0xf]
    %v379 = vld [vmem:[#allocation8 + $0xc] sm:$0xff]
    %v380 = vld [vmem:[#allocation8 + $0x14] sm:$0xf]
    %v381 = vld [vmem:[#allocation8 + $0x18] sm:$0xff]
    %v382 = vld [vmem:[#allocation8 + $0x20] sm:$0xf]
    %v383 = vld [vmem:[#allocation8 + $0x24] sm:$0xff]
    %v384 = vld [vmem:[#allocation8 + $0x2c] sm:$0xf]
    %v385 = vld [vmem:[#allocation8 + $0x30] sm:$0xff]
    %v386 = vld [vmem:[#allocation8 + $0x38] sm:$0xf]
    %v387 = vld [vmem:[#allocation8 + $0x3c] sm:$0xff]
    %v388 = vld [vmem:[#allocation8 + $0x44] sm:$0xf]
    %v389 = vld [vmem:[#allocation8 + $0x48] sm:$0xff]
    %v390 = vld [vmem:[#allocation8 + $0x50] sm:$0xf]
    %v391 = vld [vmem:[#allocation8 + $0x54] sm:$0xff]
    %v392 = vld [vmem:[#allocation8 + $0x5c] sm:$0xf]
    %v393 = vld [vmem:[#allocation8 + $0x60] sm:$0xff]
    %v394 = vld [vmem:[#allocation8 + $0x68] sm:$0xf]
    %v395 = vld [vmem:[#allocation8 + $0x6c] sm:$0xff]
    %v396 = vld [vmem:[#allocation8 + $0x74] sm:$0xf]
    %v397 = vld [vmem:[#allocation8 + $0x78] sm:$0xff]
    %v398 = vld [vmem:[#allocation8 + $0x80] sm:$0xf]
    %v399 = vld [vmem:[#allocation8 + $0x84] sm:$0xff]
    %v400 = vld [vmem:[#allocation8 + $0x8c] sm:$0xf]
    %v401 = vld [vmem:[#allocation8 + $0x90] sm:$0xff]
    %v402 = vld [vmem:[#allocation8 + $0x98] sm:$0xf]
    %v403 = vld [vmem:[#allocation8 + $0x9c] sm:$0xff]
    %v404 = vld [vmem:[#allocation8 + $0xa4] sm:$0xf]
    %v405 = vld [vmem:[#allocation8 + $0xa8] sm:$0xff]
    %v406 = vld [vmem:[#allocation8 + $0xb0] sm:$0xf]
    %v407 = vld [vmem:[#allocation8 + $0xb4] sm:$0xff]
    %v408 = vld [vmem:[#allocation8 + $0xbc] sm:$0xf]
    %v409 = vld [vmem:[#allocation8 + $0xc0] sm:$0xff]
    %v410 = vld [vmem:[#allocation8 + $0xc8] sm:$0xf]
    %v411 = vld [vmem:[#allocation8 + $0xcc] sm:$0xff]
    %v412 = vld [vmem:[#allocation8 + $0xd4] sm:$0xf]
    %v413 = vld [vmem:[#allocation8 + $0xd8] sm:$0xff]
    %v414 = vld [vmem:[#allocation8 + $0xe0] sm:$0xf]
    %v415 = vld [vmem:[#allocation8 + $0xe4] sm:$0xff]
    %v416 = vld [vmem:[#allocation8 + $0xec] sm:$0xf]
    %v417 = vld [vmem:[#allocation8 + $0xf0] sm:$0xff]
    %v418 = vld [vmem:[#allocation8 + $0xf8] sm:$0xf]
    %v419 = vld [vmem:[#allocation8 + $0xfc] sm:$0xff]
    %v420 = vld [vmem:[#allocation8 + $0x104] sm:$0xf]
    %v421 = vld [vmem:[#allocation8 + $0x108] sm:$0xff]
    %v422 = vld [vmem:[#allocation8 + $0x110] sm:$0xf]
    %v423 = vld [vmem:[#allocation8 + $0x114] sm:$0xff]
    %v424 = vld [vmem:[#allocation8 + $0x11c] sm:$0xf]
    %v425 = vld [vmem:[#allocation8 + $0x120] sm:$0xff]
    %v426 = vld [vmem:[#allocation8 + $0x128] sm:$0xf]
    %v427 = vld [vmem:[#allocation8 + $0x12c] sm:$0xff]
    %v428 = vld [vmem:[#allocation8 + $0x134] sm:$0xf]
    %v429 = vld [vmem:[#allocation8 + $0x138] sm:$0xff]
    %v430 = vld [vmem:[#allocation8 + $0x140] sm:$0xf]
    %v431 = vld [vmem:[#allocation8 + $0x144] sm:$0xff]
    %v432 = vld [vmem:[#allocation8 + $0x14c] sm:$0xf]
    %v433 = vld [vmem:[#allocation8 + $0x150] sm:$0xff]
    %v434 = vld [vmem:[#allocation8 + $0x158] sm:$0xf]
    %v435 = vld [vmem:[#allocation8 + $0x15c] sm:$0xff]
    %v436 = vld [vmem:[#allocation8 + $0x164] sm:$0xf]
    %v437 = vld [vmem:[#allocation8 + $0x168] sm:$0xff]
    %v438 = vld [vmem:[#allocation8 + $0x170] sm:$0xf]
    %v439 = vld [vmem:[#allocation8 + $0x174] sm:$0xff]
    %v440 = vld [vmem:[#allocation8 + $0x17c] sm:$0xf]
    %v441 = vld [vmem:[#allocation8 + $0x180] sm:$0xff]
    %v442 = vld [vmem:[#allocation8 + $0x188] sm:$0xf]
    %v443 = vld [vmem:[#allocation8 + $0x18c] sm:$0xff]
    %v444 = vld [vmem:[#allocation8 + $0x194] sm:$0xf]
    %v445 = vld [vmem:[#allocation8 + $0x198] sm:$0xff]
    %v446 = vld [vmem:[#allocation8 + $0x1a0] sm:$0xf]
    %v447 = vld [vmem:[#allocation8 + $0x1a4] sm:$0xff]
    %v448 = vld [vmem:[#allocation8 + $0x1ac] sm:$0xf]
    %v449 = vld [vmem:[#allocation8 + $0x1b0] sm:$0xff]
    %v450 = vld [vmem:[#allocation8 + $0x1b8] sm:$0xf]
    %v451 = vld [vmem:[#allocation8 + $0x1bc] sm:$0xff]
    %v452 = vld [vmem:[#allocation8 + $0x1c4] sm:$0xf]
    %v453 = vld [vmem:[#allocation8 + $0x1c8] sm:$0xff]
    %v454 = vld [vmem:[#allocation8 + $0x1d0] sm:$0xf]
    %v455 = vld [vmem:[#allocation8 + $0x1d4] sm:$0xff]
    %v456 = vld [vmem:[#allocation8 + $0x1dc] sm:$0xf]
    %v457 = vld [vmem:[#allocation8 + $0x1e0] sm:$0xff]
    %v458 = vld [vmem:[#allocation8 + $0x1e8] sm:$0xf]
    %v459 = vld [vmem:[#allocation8 + $0x1ec] sm:$0xff]
    %v460 = vld [vmem:[#allocation8 + $0x1f4] sm:$0xf]
    %v461 = vld [vmem:[#allocation8 + $0x1f8] sm:$0xff]
    %v462 = vld [vmem:[#allocation8 + $0x200] sm:$0xf]
    %v463 = vld [vmem:[#allocation8 + $0x204] sm:$0xff]
    %v464 = vld [vmem:[#allocation8 + $0x20c] sm:$0xf]
    %v465 = vld [vmem:[#allocation8 + $0x210] sm:$0xff]
    %v466 = vld [vmem:[#allocation8 + $0x218] sm:$0xf]
    %v467 = vld [vmem:[#allocation8 + $0x21c] sm:$0xff]
    %v468 = vld [vmem:[#allocation8 + $0x224] sm:$0xf]
    %v469 = vld [vmem:[#allocation8 + $0x228] sm:$0xff]
    %v470 = vld [vmem:[#allocation8 + $0x230] sm:$0xf]
    %v471 = vld [vmem:[#allocation8 + $0x234] sm:$0xff]
    %v472 = vld [vmem:[#allocation8 + $0x23c] sm:$0xf]
    %v473 = vld [vmem:[%s4] sm:$0x7]
    %v475 = vlaneseq
    %v476 = vshrl.u32 %v475, 7
    %v477 = vsub.s32 0, %v476
    %v478 = vrot.slane %v473, %v477
    %v479 = vlaneseq
    %v480 = vshrl.u32 %v479, 7
    %v481 = vsub.s32 1, %v480
    %v482 = vrot.slane %v473, %v481
    %v483 = vlaneseq
    %v484 = vshrl.u32 %v483, 7
    %v485 = vsub.s32 2, %v484
    %v486 = vrot.slane %v473, %v485
    %v586 = vunpack.c.l.b16 %v377
    %v587 = vunpack.c.h.b16 %v377
    %v588 = vunpack.c.l.b16 %v378
    %v589 = vunpack.c.l.b16 %v379
    %v590 = vunpack.c.h.b16 %v379
    %v591 = vunpack.c.l.b16 %v380
    %v592 = vunpack.c.l.b16 %v381
    %v593 = vunpack.c.h.b16 %v381
    %v594 = vunpack.c.l.b16 %v382
    %v595 = vunpack.c.l.b16 %v383
    %v596 = vunpack.c.h.b16 %v383
    %v597 = vunpack.c.l.b16 %v384
    %v598 = vunpack.c.l.b16 %v385
    %v599 = vunpack.c.h.b16 %v385
    %v600 = vunpack.c.l.b16 %v386
    %v601 = vunpack.c.l.b16 %v387
    %v602 = vunpack.c.h.b16 %v387
    %v603 = vunpack.c.l.b16 %v388
    %v604 = vunpack.c.l.b16 %v389
    %v605 = vunpack.c.h.b16 %v389
    %v606 = vunpack.c.l.b16 %v390
    %v607 = vunpack.c.l.b16 %v391
    %v608 = vunpack.c.h.b16 %v391
    %v609 = vunpack.c.l.b16 %v392
    %v610 = vunpack.c.l.b16 %v393
    %v611 = vunpack.c.h.b16 %v393
    %v612 = vunpack.c.l.b16 %v394
    %v613 = vunpack.c.l.b16 %v395
    %v614 = vunpack.c.h.b16 %v395
    %v615 = vunpack.c.l.b16 %v396
    %v616 = vunpack.c.l.b16 %v397
    %v617 = vunpack.c.h.b16 %v397
    %v618 = vunpack.c.l.b16 %v398
    %v619 = vunpack.c.l.b16 %v399
    %v620 = vunpack.c.h.b16 %v399
    %v621 = vunpack.c.l.b16 %v400
    %v622 = vunpack.c.l.b16 %v401
    %v623 = vunpack.c.h.b16 %v401
    %v624 = vunpack.c.l.b16 %v402
    %v625 = vunpack.c.l.b16 %v403
    %v626 = vunpack.c.h.b16 %v403
    %v627 = vunpack.c.l.b16 %v404
    %v628 = vunpack.c.l.b16 %v405
    %v629 = vunpack.c.h.b16 %v405
    %v630 = vunpack.c.l.b16 %v406
    %v631 = vunpack.c.l.b16 %v407
    %v632 = vunpack.c.h.b16 %v407
    %v633 = vunpack.c.l.b16 %v408
    %v634 = vunpack.c.l.b16 %v409
    %v635 = vunpack.c.h.b16 %v409
    %v636 = vunpack.c.l.b16 %v410
    %v637 = vunpack.c.l.b16 %v411
    %v638 = vunpack.c.h.b16 %v411
    %v639 = vunpack.c.l.b16 %v412
    %v640 = vunpack.c.l.b16 %v413
    %v641 = vunpack.c.h.b16 %v413
    %v642 = vunpack.c.l.b16 %v414
    %v643 = vunpack.c.l.b16 %v415
    %v644 = vunpack.c.h.b16 %v415
    %v645 = vunpack.c.l.b16 %v416
    %v646 = vunpack.c.l.b16 %v417
    %v647 = vunpack.c.h.b16 %v417
    %v648 = vunpack.c.l.b16 %v418
    %v649 = vunpack.c.l.b16 %v419
    %v650 = vunpack.c.h.b16 %v419
    %v651 = vunpack.c.l.b16 %v420
    %v652 = vunpack.c.l.b16 %v421
    %v653 = vunpack.c.h.b16 %v421
    %v654 = vunpack.c.l.b16 %v422
    %v655 = vunpack.c.l.b16 %v423
    %v656 = vunpack.c.h.b16 %v423
    %v657 = vunpack.c.l.b16 %v424
    %v658 = vunpack.c.l.b16 %v425
    %v659 = vunpack.c.h.b16 %v425
    %v660 = vunpack.c.l.b16 %v426
    %v661 = vunpack.c.l.b16 %v427
    %v662 = vunpack.c.h.b16 %v427
    %v663 = vunpack.c.l.b16 %v428
    %v664 = vunpack.c.l.b16 %v429
    %v665 = vunpack.c.h.b16 %v429
    %v666 = vunpack.c.l.b16 %v430
    %v667 = vunpack.c.l.b16 %v431
    %v668 = vunpack.c.h.b16 %v431
    %v669 = vunpack.c.l.b16 %v432
    %v670 = vunpack.c.l.b16 %v433
    %v671 = vunpack.c.h.b16 %v433
    %v672 = vunpack.c.l.b16 %v434
    %v673 = vunpack.c.l.b16 %v435
    %v674 = vunpack.c.h.b16 %v435
    %v675 = vunpack.c.l.b16 %v436
    %v676 = vunpack.c.l.b16 %v437
    %v677 = vunpack.c.h.b16 %v437
    %v678 = vunpack.c.l.b16 %v438
    %v679 = vunpack.c.l.b16 %v439
    %v680 = vunpack.c.h.b16 %v439
    %v681 = vunpack.c.l.b16 %v440
    %v682 = vunpack.c.l.b16 %v441
    %v683 = vunpack.c.h.b16 %v441
    %v684 = vunpack.c.l.b16 %v442
    %v685 = vunpack.c.l.b16 %v443
    %v686 = vunpack.c.h.b16 %v443
    %v687 = vunpack.c.l.b16 %v444
    %v688 = vunpack.c.l.b16 %v445
    %v689 = vunpack.c.h.b16 %v445
    %v690 = vunpack.c.l.b16 %v446
    %v691 = vunpack.c.l.b16 %v447
    %v692 = vunpack.c.h.b16 %v447
    %v693 = vunpack.c.l.b16 %v448
    %v694 = vunpack.c.l.b16 %v449
    %v695 = vunpack.c.h.b16 %v449
    %v696 = vunpack.c.l.b16 %v450
    %v697 = vunpack.c.l.b16 %v451
    %v698 = vunpack.c.h.b16 %v451
    %v699 = vunpack.c.l.b16 %v452
    %v700 = vunpack.c.l.b16 %v453
    %v701 = vunpack.c.h.b16 %v453
    %v702 = vunpack.c.l.b16 %v454
    %v703 = vunpack.c.l.b16 %v455
    %v704 = vunpack.c.h.b16 %v455
    %v705 = vunpack.c.l.b16 %v456
    %v706 = vunpack.c.l.b16 %v457
    %v707 = vunpack.c.h.b16 %v457
    %v708 = vunpack.c.l.b16 %v458
    %v709 = vunpack.c.l.b16 %v459
    %v710 = vunpack.c.h.b16 %v459
    %v711 = vunpack.c.l.b16 %v460
    %v712 = vunpack.c.l.b16 %v461
    %v713 = vunpack.c.h.b16 %v461
    %v714 = vunpack.c.l.b16 %v462
    %v715 = vunpack.c.l.b16 %v463
    %v716 = vunpack.c.h.b16 %v463
    %v717 = vunpack.c.l.b16 %v464
    %v718 = vunpack.c.l.b16 %v465
    %v719 = vunpack.c.h.b16 %v465
    %v720 = vunpack.c.l.b16 %v466
    %v721 = vunpack.c.l.b16 %v467
    %v722 = vunpack.c.h.b16 %v467
    %v723 = vunpack.c.l.b16 %v468
    %v724 = vunpack.c.l.b16 %v469
    %v725 = vunpack.c.h.b16 %v469
    %v726 = vunpack.c.l.b16 %v470
    %v727 = vunpack.c.l.b16 %v471
    %v728 = vunpack.c.h.b16 %v471
    %v729 = vunpack.c.l.b16 %v472
    %v730 = vpack.c.b16 %v589, %v586
    %v731 = vpack.c.b16 %v590, %v587
    %v732 = vpack.c.b16 %v591, %v588
    %v733 = vpack.c.b16 %v595, %v592
    %v734 = vpack.c.b16 %v596, %v593
    %v735 = vpack.c.b16 %v597, %v594
    %v736 = vpack.c.b16 %v601, %v598
    %v737 = vpack.c.b16 %v602, %v599
    %v738 = vpack.c.b16 %v603, %v600
    %v739 = vpack.c.b16 %v607, %v604
    %v740 = vpack.c.b16 %v608, %v605
    %v741 = vpack.c.b16 %v609, %v606
    %v742 = vpack.c.b16 %v613, %v610
    %v743 = vpack.c.b16 %v614, %v611
    %v744 = vpack.c.b16 %v615, %v612
    %v745 = vpack.c.b16 %v619, %v616
    %v746 = vpack.c.b16 %v620, %v617
    %v747 = vpack.c.b16 %v621, %v618
    %v748 = vpack.c.b16 %v625, %v622
    %v749 = vpack.c.b16 %v626, %v623
    %v750 = vpack.c.b16 %v627, %v624
    %v751 = vpack.c.b16 %v631, %v628
    %v752 = vpack.c.b16 %v632, %v629
    %v753 = vpack.c.b16 %v633, %v630
    %v754 = vpack.c.b16 %v637, %v634
    %v755 = vpack.c.b16 %v638, %v635
    %v756 = vpack.c.b16 %v639, %v636
    %v757 = vpack.c.b16 %v643, %v640
    %v758 = vpack.c.b16 %v644, %v641
    %v759 = vpack.c.b16 %v645, %v642
    %v760 = vpack.c.b16 %v649, %v646
    %v761 = vpack.c.b16 %v650, %v647
    %v762 = vpack.c.b16 %v651, %v648
    %v763 = vpack.c.b16 %v655, %v652
    %v764 = vpack.c.b16 %v656, %v653
    %v765 = vpack.c.b16 %v657, %v654
    %v766 = vpack.c.b16 %v661, %v658
    %v767 = vpack.c.b16 %v662, %v659
    %v768 = vpack.c.b16 %v663, %v660
    %v769 = vpack.c.b16 %v667, %v664
    %v770 = vpack.c.b16 %v668, %v665
    %v771 = vpack.c.b16 %v669, %v666
    %v772 = vpack.c.b16 %v673, %v670
    %v773 = vpack.c.b16 %v674, %v671
    %v774 = vpack.c.b16 %v675, %v672
    %v775 = vpack.c.b16 %v679, %v676
    %v776 = vpack.c.b16 %v680, %v677
    %v777 = vpack.c.b16 %v681, %v678
    %v778 = vpack.c.b16 %v685, %v682
    %v779 = vpack.c.b16 %v686, %v683
    %v780 = vpack.c.b16 %v687, %v684
    %v781 = vpack.c.b16 %v691, %v688
    %v782 = vpack.c.b16 %v692, %v689
    %v783 = vpack.c.b16 %v693, %v690
    %v784 = vpack.c.b16 %v697, %v694
    %v785 = vpack.c.b16 %v698, %v695
    %v786 = vpack.c.b16 %v699, %v696
    %v787 = vpack.c.b16 %v703, %v700
    %v788 = vpack.c.b16 %v704, %v701
    %v789 = vpack.c.b16 %v705, %v702
    %v790 = vpack.c.b16 %v709, %v706
    %v791 = vpack.c.b16 %v710, %v707
    %v792 = vpack.c.b16 %v711, %v708
    %v793 = vpack.c.b16 %v715, %v712
    %v794 = vpack.c.b16 %v716, %v713
    %v795 = vpack.c.b16 %v717, %v714
    %v796 = vpack.c.b16 %v721, %v718
    %v797 = vpack.c.b16 %v722, %v719
    %v798 = vpack.c.b16 %v723, %v720
    %v799 = vpack.c.b16 %v727, %v724
    %v800 = vpack.c.b16 %v728, %v725
    %v801 = vpack.c.b16 %v729, %v726
    %874 = vmatprep.subr.bf16.mxu0 %v752
    %875 = vmatpush1.bf16.msra.mxu0 %v751
    %876 = vmatprep.subr.bf16.mxu0 %v749
    %877 = vmatpush1.bf16.msra.mxu0 %v748
    %878 = vmatprep.subr.bf16.mxu0 %v746
    %879 = vmatpush1.bf16.msra.mxu0 %v745
    %880 = vmatprep.subr.bf16.mxu0 %v743
    %881 = vmatpush1.bf16.msra.mxu0 %v742
    %882 = vmatprep.subr.bf16.mxu0 %v740
    %883 = vmatpush1.bf16.msra.mxu0 %v739
    %884 = vmatprep.subr.bf16.mxu0 %v737
    %885 = vmatpush1.bf16.msra.mxu0 %v736
    %886 = vmatprep.subr.bf16.mxu0 %v734
    %887 = vmatpush1.bf16.msra.mxu0 %v733
    %888 = vmatprep.subr.bf16.mxu0 %v731
    %889 = vmatpush1.bf16.msra.mxu0 %v730
    %890 = vmatprep.subr.bf16.mxu0 %v776
    %891 = vmatpush2.bf16.msra.mxu0 %v775
    %892 = vmatprep.subr.bf16.mxu0 %v773
    %893 = vmatpush2.bf16.msra.mxu0 %v772
    %894 = vmatprep.subr.bf16.mxu0 %v770
    %895 = vmatpush2.bf16.msra.mxu0 %v769
    %896 = vmatprep.subr.bf16.mxu0 %v767
    %897 = vmatpush2.bf16.msra.mxu0 %v766
    %898 = vmatprep.subr.bf16.mxu0 %v764
    %899 = vmatpush2.bf16.msra.mxu0 %v763
    %900 = vmatprep.subr.bf16.mxu0 %v761
    %901 = vmatpush2.bf16.msra.mxu0 %v760
    %902 = vmatprep.subr.bf16.mxu0 %v758
    %903 = vmatpush2.bf16.msra.mxu0 %v757
    %904 = vmatprep.subr.bf16.mxu0 %v755
    %905 = vmatpush2.bf16.msra.mxu0 %v754
    %906 = vmatprep.mubr.bf16.mxu0 %v375
    %907 = vmatmul.mubr.bf16.gmra.mxu0 %v374
    %v908 = vpop.f32.mrf.mxu0
    %v909 = vadd.f32 %v478, %v908
    %v910 = vpop.f32.mrf.mxu0
    %v911 = vadd.f32 %v482, %v910
    %v912 = vpop.f32.mrf.mxu0
    %v913 = vpop.f32.mrf.mxu0
    %914 = vdwg.mxu0
    %915 = vmatprep.subr.bf16.mxu0 %v800
    %916 = vmatpush1.bf16.msra.mxu0 %v799
    %917 = vmatprep.subr.bf16.mxu0 %v797
    %918 = vmatpush1.bf16.msra.mxu0 %v796
    %919 = vmatprep.subr.bf16.mxu0 %v794
    %920 = vmatpush1.bf16.msra.mxu0 %v793
    %921 = vmatprep.subr.bf16.mxu0 %v791
    %922 = vmatpush1.bf16.msra.mxu0 %v790
    %923 = vmatprep.subr.bf16.mxu0 %v788
    %924 = vmatpush1.bf16.msra.mxu0 %v787
    %925 = vmatprep.subr.bf16.mxu0 %v785
    %926 = vmatpush1.bf16.msra.mxu0 %v784
    %927 = vmatprep.subr.bf16.mxu0 %v782
    %928 = vmatpush1.bf16.msra.mxu0 %v781
    %929 = vmatprep.subr.bf16.mxu0 %v779
    %930 = vmatpush1.bf16.msra.mxu0 %v778
    %931 = vmatprep.subr.bf16.mxu0 0
    %932 = vmatpush2.bf16.msra.mxu0 0
    %933 = vmatprep.subr.bf16.mxu0 0
    %934 = vmatpush2.bf16.msra.mxu0 0
    %935 = vmatprep.subr.bf16.mxu0 0
    %936 = vmatpush2.bf16.msra.mxu0 0
    %937 = vmatprep.subr.bf16.mxu0 0
    %938 = vmatpush2.bf16.msra.mxu0 0
    %939 = vmatprep.subr.bf16.mxu0 0
    %940 = vmatpush2.bf16.msra.mxu0 0
    %941 = vmatprep.subr.bf16.mxu0 0
    %942 = vmatpush2.bf16.msra.mxu0 0
    %943 = vmatprep.subr.bf16.mxu0 0
    %944 = vmatpush2.bf16.msra.mxu0 0
    %945 = vmatprep.subr.bf16.mxu0 0
    %946 = vmatpush2.bf16.msra.mxu0 0
    %947 = vmatprep.mubr.bf16.mxu0 0
    %948 = vmatmul.mubr.bf16.gmra.mxu0 %v376
    %v949 = vpop.f32.mrf.mxu0
    %v950 = vadd.f32 %v909, %v949
    %v951 = vpop.f32.mrf.mxu0
    %v952 = vadd.f32 %v911, %v951
    %v953 = vpop.f32.mrf.mxu0
    %v954 = vpop.f32.mrf.mxu0
    %955 = vdwg.mxu0
    %956 = vmatprep.subr.bf16.mxu0 0
    %957 = vmatpush1.bf16.msra.mxu0 %v753
    %958 = vmatprep.subr.bf16.mxu0 0
    %959 = vmatpush1.bf16.msra.mxu0 %v750
    %960 = vmatprep.subr.bf16.mxu0 0
    %961 = vmatpush1.bf16.msra.mxu0 %v747
    %962 = vmatprep.subr.bf16.mxu0 0
    %963 = vmatpush1.bf16.msra.mxu0 %v744
    %964 = vmatprep.subr.bf16.mxu0 0
    %965 = vmatpush1.bf16.msra.mxu0 %v741
    %966 = vmatprep.subr.bf16.mxu0 0
    %967 = vmatpush1.bf16.msra.mxu0 %v738
    %968 = vmatprep.subr.bf16.mxu0 0
    %969 = vmatpush1.bf16.msra.mxu0 %v735
    %970 = vmatprep.subr.bf16.mxu0 0
    %971 = vmatpush1.bf16.msra.mxu0 %v732
    %972 = vmatprep.subr.bf16.mxu0 0
    %973 = vmatpush2.bf16.msra.mxu0 %v777
    %974 = vmatprep.subr.bf16.mxu0 0
    %975 = vmatpush2.bf16.msra.mxu0 %v774
    %976 = vmatprep.subr.bf16.mxu0 0
    %977 = vmatpush2.bf16.msra.mxu0 %v771
    %978 = vmatprep.subr.bf16.mxu0 0
    %979 = vmatpush2.bf16.msra.mxu0 %v768
    %980 = vmatprep.subr.bf16.mxu0 0
    %981 = vmatpush2.bf16.msra.mxu0 %v765
    %982 = vmatprep.subr.bf16.mxu0 0
    %983 = vmatpush2.bf16.msra.mxu0 %v762
    %984 = vmatprep.subr.bf16.mxu0 0
    %985 = vmatpush2.bf16.msra.mxu0 %v759
    %986 = vmatprep.subr.bf16.mxu0 0
    %987 = vmatpush2.bf16.msra.mxu0 %v756
    %988 = vmatprep.mubr.bf16.mxu0 %v375
    %989 = vmatmul.mubr.bf16.gmra.mxu0 %v374
    %v990 = vpop.f32.mrf.mxu0
    %v991 = vadd.f32 %v486, %v990
    %v992 = vpop.f32.mrf.mxu0
    %v993 = vpop.f32.mrf.mxu0
    %v994 = vpop.f32.mrf.mxu0
    %995 = vdwg.mxu0
    %996 = vmatprep.subr.bf16.mxu0 0
    %997 = vmatpush1.bf16.msra.mxu0 %v801
    %998 = vmatprep.subr.bf16.mxu0 0
    %999 = vmatpush1.bf16.msra.mxu0 %v798
    %1000 = vmatprep.subr.bf16.mxu0 0
    %1001 = vmatpush1.bf16.msra.mxu0 %v795
    %1002 = vmatprep.subr.bf16.mxu0 0
    %1003 = vmatpush1.bf16.msra.mxu0 %v792
    %1004 = vmatprep.subr.bf16.mxu0 0
    %1005 = vmatpush1.bf16.msra.mxu0 %v789
    %1006 = vmatprep.subr.bf16.mxu0 0
    %1007 = vmatpush1.bf16.msra.mxu0 %v786
    %1008 = vmatprep.subr.bf16.mxu0 0
    %1009 = vmatpush1.bf16.msra.mxu0 %v783
    %1010 = vmatprep.subr.bf16.mxu0 0
    %1011 = vmatpush1.bf16.msra.mxu0 %v780
    %1012 = vmatprep.subr.bf16.mxu0 0
    %1013 = vmatpush2.bf16.msra.mxu0 0
    %1014 = vmatprep.subr.bf16.mxu0 0
    %1015 = vmatpush2.bf16.msra.mxu0 0
    %1016 = vmatprep.subr.bf16.mxu0 0
    %1017 = vmatpush2.bf16.msra.mxu0 0
    %1018 = vmatprep.subr.bf16.mxu0 0
    %1019 = vmatpush2.bf16.msra.mxu0 0
    %1020 = vmatprep.subr.bf16.mxu0 0
    %1021 = vmatpush2.bf16.msra.mxu0 0
    %1022 = vmatprep.subr.bf16.mxu0 0
    %1023 = vmatpush2.bf16.msra.mxu0 0
    %1024 = vmatprep.subr.bf16.mxu0 0
    %1025 = vmatpush2.bf16.msra.mxu0 0
    %1026 = vmatprep.subr.bf16.mxu0 0
    %1027 = vmatpush2.bf16.msra.mxu0 0
    %1028 = vmatprep.mubr.bf16.mxu0 0
    %1029 = vmatmul.mubr.bf16.gmra.mxu0 %v376
    %v1030 = vpop.f32.mrf.mxu0
    %v1031 = vadd.f32 %v991, %v1030
    %v1032 = vpop.f32.mrf.mxu0
    %v1033 = vpop.f32.mrf.mxu0
    %v1034 = vpop.f32.mrf.mxu0
    %1035 = vdwg.mxu0
    %v1036 = vmax.f32 %v950, 0.0
    %v1037 = vmax.f32 %v952, 0.0
    %v1038 = vmax.f32 %v1031, 0.0
    %v1039 = vpack.c.bf16 %v1036, %v1036
    %v1040 = vpack.c.bf16 %v1037, %v1037
    %v1041 = vpack.c.bf16 %v1038, %v1038
    %v1042 = vld [vmem:[#allocation9] sm:$0xff]
    %v1043 = vld [vmem:[#allocation9 + $0x8] sm:$0xf]
    %v1044 = vld [vmem:[#allocation9 + $0xc] sm:$0xff]
    %v1045 = vld [vmem:[#allocation9 + $0x14] sm:$0xf]
    %v1046 = vld [vmem:[#allocation9 + $0x18] sm:$0xff]
    %v1047 = vld [vmem:[#allocation9 + $0x20] sm:$0xf]
    %v1048 = vld [vmem:[#allocation9 + $0x24] sm:$0xff]
    %v1049 = vld [vmem:[#allocation9 + $0x2c] sm:$0xf]
    %v1050 = vld [vmem:[#allocation9 + $0x30] sm:$0xff]
    %v1051 = vld [vmem:[#allocation9 + $0x38] sm:$0xf]
    %v1052 = vld [vmem:[#allocation9 + $0x3c] sm:$0xff]
    %v1053 = vld [vmem:[#allocation9 + $0x44] sm:$0xf]
    %v1054 = vld [vmem:[#allocation9 + $0x48] sm:$0xff]
    %v1055 = vld [vmem:[#allocation9 + $0x50] sm:$0xf]
    %v1056 = vld [vmem:[#allocation9 + $0x54] sm:$0xff]
    %v1057 = vld [vmem:[#allocation9 + $0x5c] sm:$0xf]
    %v1058 = vld [vmem:[#allocation9 + $0x60] sm:$0xff]
    %v1059 = vld [vmem:[#allocation9 + $0x68] sm:$0xf]
    %v1060 = vld [vmem:[#allocation9 + $0x6c] sm:$0xff]
    %v1061 = vld [vmem:[#allocation9 + $0x74] sm:$0xf]
    %v1062 = vld [vmem:[#allocation9 + $0x78] sm:$0xff]
    %v1063 = vld [vmem:[#allocation9 + $0x80] sm:$0xf]
    %v1064 = vld [vmem:[#allocation9 + $0x84] sm:$0xff]
    %v1065 = vld [vmem:[#allocation9 + $0x8c] sm:$0xf]
    %v1066 = vld [vmem:[#allocation9 + $0x90] sm:$0xff]
    %v1067 = vld [vmem:[#allocation9 + $0x98] sm:$0xf]
    %v1068 = vld [vmem:[#allocation9 + $0x9c] sm:$0xff]
    %v1069 = vld [vmem:[#allocation9 + $0xa4] sm:$0xf]
    %v1070 = vld [vmem:[#allocation9 + $0xa8] sm:$0xff]
    %v1071 = vld [vmem:[#allocation9 + $0xb0] sm:$0xf]
    %v1072 = vld [vmem:[#allocation9 + $0xb4] sm:$0xff]
    %v1073 = vld [vmem:[#allocation9 + $0xbc] sm:$0xf]
    %v1074 = vld [vmem:[#allocation9 + $0xc0] sm:$0xff]
    %v1075 = vld [vmem:[#allocation9 + $0xc8] sm:$0xf]
    %v1076 = vld [vmem:[#allocation9 + $0xcc] sm:$0xff]
    %v1077 = vld [vmem:[#allocation9 + $0xd4] sm:$0xf]
    %v1078 = vld [vmem:[#allocation9 + $0xd8] sm:$0xff]
    %v1079 = vld [vmem:[#allocation9 + $0xe0] sm:$0xf]
    %v1080 = vld [vmem:[#allocation9 + $0xe4] sm:$0xff]
    %v1081 = vld [vmem:[#allocation9 + $0xec] sm:$0xf]
    %v1082 = vld [vmem:[#allocation9 + $0xf0] sm:$0xff]
    %v1083 = vld [vmem:[#allocation9 + $0xf8] sm:$0xf]
    %v1084 = vld [vmem:[#allocation9 + $0xfc] sm:$0xff]
    %v1085 = vld [vmem:[#allocation9 + $0x104] sm:$0xf]
    %v1086 = vld [vmem:[#allocation9 + $0x108] sm:$0xff]
    %v1087 = vld [vmem:[#allocation9 + $0x110] sm:$0xf]
    %v1088 = vld [vmem:[#allocation9 + $0x114] sm:$0xff]
    %v1089 = vld [vmem:[#allocation9 + $0x11c] sm:$0xf]
    %v1090 = vld [vmem:[#allocation9 + $0x120] sm:$0xff]
    %v1091 = vld [vmem:[#allocation9 + $0x128] sm:$0xf]
    %v1092 = vld [vmem:[#allocation9 + $0x12c] sm:$0xff]
    %v1093 = vld [vmem:[#allocation9 + $0x134] sm:$0xf]
    %v1094 = vld [vmem:[#allocation9 + $0x138] sm:$0xff]
    %v1095 = vld [vmem:[#allocation9 + $0x140] sm:$0xf]
    %v1096 = vld [vmem:[#allocation9 + $0x144] sm:$0xff]
    %v1097 = vld [vmem:[#allocation9 + $0x14c] sm:$0xf]
    %v1098 = vld [vmem:[#allocation9 + $0x150] sm:$0xff]
    %v1099 = vld [vmem:[#allocation9 + $0x158] sm:$0xf]
    %v1100 = vld [vmem:[#allocation9 + $0x15c] sm:$0xff]
    %v1101 = vld [vmem:[#allocation9 + $0x164] sm:$0xf]
    %v1102 = vld [vmem:[#allocation9 + $0x168] sm:$0xff]
    %v1103 = vld [vmem:[#allocation9 + $0x170] sm:$0xf]
    %v1104 = vld [vmem:[#allocation9 + $0x174] sm:$0xff]
    %v1105 = vld [vmem:[#allocation9 + $0x17c] sm:$0xf]
    %v1106 = vld [vmem:[#allocation9 + $0x180] sm:$0xff]
    %v1107 = vld [vmem:[#allocation9 + $0x188] sm:$0xf]
    %v1108 = vld [vmem:[#allocation9 + $0x18c] sm:$0xff]
    %v1109 = vld [vmem:[#allocation9 + $0x194] sm:$0xf]
    %v1110 = vld [vmem:[#allocation9 + $0x198] sm:$0xff]
    %v1111 = vld [vmem:[#allocation9 + $0x1a0] sm:$0xf]
    %v1112 = vld [vmem:[#allocation9 + $0x1a4] sm:$0xff]
    %v1113 = vld [vmem:[#allocation9 + $0x1ac] sm:$0xf]
    %v1114 = vld [vmem:[#allocation9 + $0x1b0] sm:$0xff]
    %v1115 = vld [vmem:[#allocation9 + $0x1b8] sm:$0xf]
    %v1116 = vld [vmem:[#allocation9 + $0x1bc] sm:$0xff]
    %v1117 = vld [vmem:[#allocation9 + $0x1c4] sm:$0xf]
    %v1118 = vld [vmem:[#allocation9 + $0x1c8] sm:$0xff]
    %v1119 = vld [vmem:[#allocation9 + $0x1d0] sm:$0xf]
    %v1120 = vld [vmem:[#allocation9 + $0x1d4] sm:$0xff]
    %v1121 = vld [vmem:[#allocation9 + $0x1dc] sm:$0xf]
    %v1122 = vld [vmem:[#allocation9 + $0x1e0] sm:$0xff]
    %v1123 = vld [vmem:[#allocation9 + $0x1e8] sm:$0xf]
    %v1124 = vld [vmem:[#allocation9 + $0x1ec] sm:$0xff]
    %v1125 = vld [vmem:[#allocation9 + $0x1f4] sm:$0xf]
    %v1126 = vld [vmem:[#allocation9 + $0x1f8] sm:$0xff]
    %v1127 = vld [vmem:[#allocation9 + $0x200] sm:$0xf]
    %v1128 = vld [vmem:[#allocation9 + $0x204] sm:$0xff]
    %v1129 = vld [vmem:[#allocation9 + $0x20c] sm:$0xf]
    %v1130 = vld [vmem:[#allocation9 + $0x210] sm:$0xff]
    %v1131 = vld [vmem:[#allocation9 + $0x218] sm:$0xf]
    %v1132 = vld [vmem:[#allocation9 + $0x21c] sm:$0xff]
    %v1133 = vld [vmem:[#allocation9 + $0x224] sm:$0xf]
    %v1134 = vld [vmem:[#allocation9 + $0x228] sm:$0xff]
    %v1135 = vld [vmem:[#allocation9 + $0x230] sm:$0xf]
    %v1136 = vld [vmem:[#allocation9 + $0x234] sm:$0xff]
    %v1137 = vld [vmem:[#allocation9 + $0x23c] sm:$0xf]
    %v1138 = vld [vmem:[%s6] sm:$0x7]
    %v1140 = vlaneseq
    %v1141 = vshrl.u32 %v1140, 7
    %v1142 = vsub.s32 0, %v1141
    %v1143 = vrot.slane %v1138, %v1142
    %v1144 = vlaneseq
    %v1145 = vshrl.u32 %v1144, 7
    %v1146 = vsub.s32 1, %v1145
    %v1147 = vrot.slane %v1138, %v1146
    %v1148 = vlaneseq
    %v1149 = vshrl.u32 %v1148, 7
    %v1150 = vsub.s32 2, %v1149
    %v1151 = vrot.slane %v1138, %v1150
    %v1251 = vunpack.c.l.b16 %v1042
    %v1252 = vunpack.c.h.b16 %v1042
    %v1253 = vunpack.c.l.b16 %v1043
    %v1254 = vunpack.c.l.b16 %v1044
    %v1255 = vunpack.c.h.b16 %v1044
    %v1256 = vunpack.c.l.b16 %v1045
    %v1257 = vunpack.c.l.b16 %v1046
    %v1258 = vunpack.c.h.b16 %v1046
    %v1259 = vunpack.c.l.b16 %v1047
    %v1260 = vunpack.c.l.b16 %v1048
    %v1261 = vunpack.c.h.b16 %v1048
    %v1262 = vunpack.c.l.b16 %v1049
    %v1263 = vunpack.c.l.b16 %v1050
    %v1264 = vunpack.c.h.b16 %v1050
    %v1265 = vunpack.c.l.b16 %v1051
    %v1266 = vunpack.c.l.b16 %v1052
    %v1267 = vunpack.c.h.b16 %v1052
    %v1268 = vunpack.c.l.b16 %v1053
    %v1269 = vunpack.c.l.b16 %v1054
    %v1270 = vunpack.c.h.b16 %v1054
    %v1271 = vunpack.c.l.b16 %v1055
    %v1272 = vunpack.c.l.b16 %v1056
    %v1273 = vunpack.c.h.b16 %v1056
    %v1274 = vunpack.c.l.b16 %v1057
    %v1275 = vunpack.c.l.b16 %v1058
    %v1276 = vunpack.c.h.b16 %v1058
    %v1277 = vunpack.c.l.b16 %v1059
    %v1278 = vunpack.c.l.b16 %v1060
    %v1279 = vunpack.c.h.b16 %v1060
    %v1280 = vunpack.c.l.b16 %v1061
    %v1281 = vunpack.c.l.b16 %v1062
    %v1282 = vunpack.c.h.b16 %v1062
    %v1283 = vunpack.c.l.b16 %v1063
    %v1284 = vunpack.c.l.b16 %v1064
    %v1285 = vunpack.c.h.b16 %v1064
    %v1286 = vunpack.c.l.b16 %v1065
    %v1287 = vunpack.c.l.b16 %v1066
    %v1288 = vunpack.c.h.b16 %v1066
    %v1289 = vunpack.c.l.b16 %v1067
    %v1290 = vunpack.c.l.b16 %v1068
    %v1291 = vunpack.c.h.b16 %v1068
    %v1292 = vunpack.c.l.b16 %v1069
    %v1293 = vunpack.c.l.b16 %v1070
    %v1294 = vunpack.c.h.b16 %v1070
    %v1295 = vunpack.c.l.b16 %v1071
    %v1296 = vunpack.c.l.b16 %v1072
    %v1297 = vunpack.c.h.b16 %v1072
    %v1298 = vunpack.c.l.b16 %v1073
    %v1299 = vunpack.c.l.b16 %v1074
    %v1300 = vunpack.c.h.b16 %v1074
    %v1301 = vunpack.c.l.b16 %v1075
    %v1302 = vunpack.c.l.b16 %v1076
    %v1303 = vunpack.c.h.b16 %v1076
    %v1304 = vunpack.c.l.b16 %v1077
    %v1305 = vunpack.c.l.b16 %v1078
    %v1306 = vunpack.c.h.b16 %v1078
    %v1307 = vunpack.c.l.b16 %v1079
    %v1308 = vunpack.c.l.b16 %v1080
    %v1309 = vunpack.c.h.b16 %v1080
    %v1310 = vunpack.c.l.b16 %v1081
    %v1311 = vunpack.c.l.b16 %v1082
    %v1312 = vunpack.c.h.b16 %v1082
    %v1313 = vunpack.c.l.b16 %v1083
    %v1314 = vunpack.c.l.b16 %v1084
    %v1315 = vunpack.c.h.b16 %v1084
    %v1316 = vunpack.c.l.b16 %v1085
    %v1317 = vunpack.c.l.b16 %v1086
    %v1318 = vunpack.c.h.b16 %v1086
    %v1319 = vunpack.c.l.b16 %v1087
    %v1320 = vunpack.c.l.b16 %v1088
    %v1321 = vunpack.c.h.b16 %v1088
    %v1322 = vunpack.c.l.b16 %v1089
    %v1323 = vunpack.c.l.b16 %v1090
    %v1324 = vunpack.c.h.b16 %v1090
    %v1325 = vunpack.c.l.b16 %v1091
    %v1326 = vunpack.c.l.b16 %v1092
    %v1327 = vunpack.c.h.b16 %v1092
    %v1328 = vunpack.c.l.b16 %v1093
    %v1329 = vunpack.c.l.b16 %v1094
    %v1330 = vunpack.c.h.b16 %v1094
    %v1331 = vunpack.c.l.b16 %v1095
    %v1332 = vunpack.c.l.b16 %v1096
    %v1333 = vunpack.c.h.b16 %v1096
    %v1334 = vunpack.c.l.b16 %v1097
    %v1335 = vunpack.c.l.b16 %v1098
    %v1336 = vunpack.c.h.b16 %v1098
    %v1337 = vunpack.c.l.b16 %v1099
    %v1338 = vunpack.c.l.b16 %v1100
    %v1339 = vunpack.c.h.b16 %v1100
    %v1340 = vunpack.c.l.b16 %v1101
    %v1341 = vunpack.c.l.b16 %v1102
    %v1342 = vunpack.c.h.b16 %v1102
    %v1343 = vunpack.c.l.b16 %v1103
    %v1344 = vunpack.c.l.b16 %v1104
    %v1345 = vunpack.c.h.b16 %v1104
    %v1346 = vunpack.c.l.b16 %v1105
    %v1347 = vunpack.c.l.b16 %v1106
    %v1348 = vunpack.c.h.b16 %v1106
    %v1349 = vunpack.c.l.b16 %v1107
    %v1350 = vunpack.c.l.b16 %v1108
    %v1351 = vunpack.c.h.b16 %v1108
    %v1352 = vunpack.c.l.b16 %v1109
    %v1353 = vunpack.c.l.b16 %v1110
    %v1354 = vunpack.c.h.b16 %v1110
    %v1355 = vunpack.c.l.b16 %v1111
    %v1356 = vunpack.c.l.b16 %v1112
    %v1357 = vunpack.c.h.b16 %v1112
    %v1358 = vunpack.c.l.b16 %v1113
    %v1359 = vunpack.c.l.b16 %v1114
    %v1360 = vunpack.c.h.b16 %v1114
    %v1361 = vunpack.c.l.b16 %v1115
    %v1362 = vunpack.c.l.b16 %v1116
    %v1363 = vunpack.c.h.b16 %v1116
    %v1364 = vunpack.c.l.b16 %v1117
    %v1365 = vunpack.c.l.b16 %v1118
    %v1366 = vunpack.c.h.b16 %v1118
    %v1367 = vunpack.c.l.b16 %v1119
    %v1368 = vunpack.c.l.b16 %v1120
    %v1369 = vunpack.c.h.b16 %v1120
    %v1370 = vunpack.c.l.b16 %v1121
    %v1371 = vunpack.c.l.b16 %v1122
    %v1372 = vunpack.c.h.b16 %v1122
    %v1373 = vunpack.c.l.b16 %v1123
    %v1374 = vunpack.c.l.b16 %v1124
    %v1375 = vunpack.c.h.b16 %v1124
    %v1376 = vunpack.c.l.b16 %v1125
    %v1377 = vunpack.c.l.b16 %v1126
    %v1378 = vunpack.c.h.b16 %v1126
    %v1379 = vunpack.c.l.b16 %v1127
    %v1380 = vunpack.c.l.b16 %v1128
    %v1381 = vunpack.c.h.b16 %v1128
    %v1382 = vunpack.c.l.b16 %v1129
    %v1383 = vunpack.c.l.b16 %v1130
    %v1384 = vunpack.c.h.b16 %v1130
    %v1385 = vunpack.c.l.b16 %v1131
    %v1386 = vunpack.c.l.b16 %v1132
    %v1387 = vunpack.c.h.b16 %v1132
    %v1388 = vunpack.c.l.b16 %v1133
    %v1389 = vunpack.c.l.b16 %v1134
    %v1390 = vunpack.c.h.b16 %v1134
    %v1391 = vunpack.c.l.b16 %v1135
    %v1392 = vunpack.c.l.b16 %v1136
    %v1393 = vunpack.c.h.b16 %v1136
    %v1394 = vunpack.c.l.b16 %v1137
    %v1395 = vpack.c.b16 %v1254, %v1251
    %v1396 = vpack.c.b16 %v1255, %v1252
    %v1397 = vpack.c.b16 %v1256, %v1253
    %v1398 = vpack.c.b16 %v1260, %v1257
    %v1399 = vpack.c.b16 %v1261, %v1258
    %v1400 = vpack.c.b16 %v1262, %v1259
    %v1401 = vpack.c.b16 %v1266, %v1263
    %v1402 = vpack.c.b16 %v1267, %v1264
    %v1403 = vpack.c.b16 %v1268, %v1265
    %v1404 = vpack.c.b16 %v1272, %v1269
    %v1405 = vpack.c.b16 %v1273, %v1270
    %v1406 = vpack.c.b16 %v1274, %v1271
    %v1407 = vpack.c.b16 %v1278, %v1275
    %v1408 = vpack.c.b16 %v1279, %v1276
    %v1409 = vpack.c.b16 %v1280, %v1277
    %v1410 = vpack.c.b16 %v1284, %v1281
    %v1411 = vpack.c.b16 %v1285, %v1282
    %v1412 = vpack.c.b16 %v1286, %v1283
    %v1413 = vpack.c.b16 %v1290, %v1287
    %v1414 = vpack.c.b16 %v1291, %v1288
    %v1415 = vpack.c.b16 %v1292, %v1289
    %v1416 = vpack.c.b16 %v1296, %v1293
    %v1417 = vpack.c.b16 %v1297, %v1294
    %v1418 = vpack.c.b16 %v1298, %v1295
    %v1419 = vpack.c.b16 %v1302, %v1299
    %v1420 = vpack.c.b16 %v1303, %v1300
    %v1421 = vpack.c.b16 %v1304, %v1301
    %v1422 = vpack.c.b16 %v1308, %v1305
    %v1423 = vpack.c.b16 %v1309, %v1306
    %v1424 = vpack.c.b16 %v1310, %v1307
    %v1425 = vpack.c.b16 %v1314, %v1311
    %v1426 = vpack.c.b16 %v1315, %v1312
    %v1427 = vpack.c.b16 %v1316, %v1313
    %v1428 = vpack.c.b16 %v1320, %v1317
    %v1429 = vpack.c.b16 %v1321, %v1318
    %v1430 = vpack.c.b16 %v1322, %v1319
    %v1431 = vpack.c.b16 %v1326, %v1323
    %v1432 = vpack.c.b16 %v1327, %v1324
    %v1433 = vpack.c.b16 %v1328, %v1325
    %v1434 = vpack.c.b16 %v1332, %v1329
    %v1435 = vpack.c.b16 %v1333, %v1330
    %v1436 = vpack.c.b16 %v1334, %v1331
    %v1437 = vpack.c.b16 %v1338, %v1335
    %v1438 = vpack.c.b16 %v1339, %v1336
    %v1439 = vpack.c.b16 %v1340, %v1337
    %v1440 = vpack.c.b16 %v1344, %v1341
    %v1441 = vpack.c.b16 %v1345, %v1342
    %v1442 = vpack.c.b16 %v1346, %v1343
    %v1443 = vpack.c.b16 %v1350, %v1347
    %v1444 = vpack.c.b16 %v1351, %v1348
    %v1445 = vpack.c.b16 %v1352, %v1349
    %v1446 = vpack.c.b16 %v1356, %v1353
    %v1447 = vpack.c.b16 %v1357, %v1354
    %v1448 = vpack.c.b16 %v1358, %v1355
    %v1449 = vpack.c.b16 %v1362, %v1359
    %v1450 = vpack.c.b16 %v1363, %v1360
    %v1451 = vpack.c.b16 %v1364, %v1361
    %v1452 = vpack.c.b16 %v1368, %v1365
    %v1453 = vpack.c.b16 %v1369, %v1366
    %v1454 = vpack.c.b16 %v1370, %v1367
    %v1455 = vpack.c.b16 %v1374, %v1371
    %v1456 = vpack.c.b16 %v1375, %v1372
    %v1457 = vpack.c.b16 %v1376, %v1373
    %v1458 = vpack.c.b16 %v1380, %v1377
    %v1459 = vpack.c.b16 %v1381, %v1378
    %v1460 = vpack.c.b16 %v1382, %v1379
    %v1461 = vpack.c.b16 %v1386, %v1383
    %v1462 = vpack.c.b16 %v1387, %v1384
    %v1463 = vpack.c.b16 %v1388, %v1385
    %v1464 = vpack.c.b16 %v1392, %v1389
    %v1465 = vpack.c.b16 %v1393, %v1390
    %v1466 = vpack.c.b16 %v1394, %v1391
    %1539 = vmatprep.subr.bf16.mxu0 %v1417
    %1540 = vmatpush1.bf16.msra.mxu0 %v1416
    %1541 = vmatprep.subr.bf16.mxu0 %v1414
    %1542 = vmatpush1.bf16.msra.mxu0 %v1413
    %1543 = vmatprep.subr.bf16.mxu0 %v1411
    %1544 = vmatpush1.bf16.msra.mxu0 %v1410
    %1545 = vmatprep.subr.bf16.mxu0 %v1408
    %1546 = vmatpush1.bf16.msra.mxu0 %v1407
    %1547 = vmatprep.subr.bf16.mxu0 %v1405
    %1548 = vmatpush1.bf16.msra.mxu0 %v1404
    %1549 = vmatprep.subr.bf16.mxu0 %v1402
    %1550 = vmatpush1.bf16.msra.mxu0 %v1401
    %1551 = vmatprep.subr.bf16.mxu0 %v1399
    %1552 = vmatpush1.bf16.msra.mxu0 %v1398
    %1553 = vmatprep.subr.bf16.mxu0 %v1396
    %1554 = vmatpush1.bf16.msra.mxu0 %v1395
    %1555 = vmatprep.subr.bf16.mxu0 %v1441
    %1556 = vmatpush2.bf16.msra.mxu0 %v1440
    %1557 = vmatprep.subr.bf16.mxu0 %v1438
    %1558 = vmatpush2.bf16.msra.mxu0 %v1437
    %1559 = vmatprep.subr.bf16.mxu0 %v1435
    %1560 = vmatpush2.bf16.msra.mxu0 %v1434
    %1561 = vmatprep.subr.bf16.mxu0 %v1432
    %1562 = vmatpush2.bf16.msra.mxu0 %v1431
    %1563 = vmatprep.subr.bf16.mxu0 %v1429
    %1564 = vmatpush2.bf16.msra.mxu0 %v1428
    %1565 = vmatprep.subr.bf16.mxu0 %v1426
    %1566 = vmatpush2.bf16.msra.mxu0 %v1425
    %1567 = vmatprep.subr.bf16.mxu0 %v1423
    %1568 = vmatpush2.bf16.msra.mxu0 %v1422
    %1569 = vmatprep.subr.bf16.mxu0 %v1420
    %1570 = vmatpush2.bf16.msra.mxu0 %v1419
    %1571 = vmatprep.mubr.bf16.mxu0 %v1040
    %1572 = vmatmul.mubr.bf16.gmra.mxu0 %v1039
    %v1573 = vpop.f32.mrf.mxu0
    %v1574 = vadd.f32 %v1143, %v1573
    %v1575 = vpop.f32.mrf.mxu0
    %v1576 = vadd.f32 %v1147, %v1575
    %v1577 = vpop.f32.mrf.mxu0
    %v1578 = vpop.f32.mrf.mxu0
    %1579 = vdwg.mxu0
    %1580 = vmatprep.subr.bf16.mxu0 %v1465
    %1581 = vmatpush1.bf16.msra.mxu0 %v1464
    %1582 = vmatprep.subr.bf16.mxu0 %v1462
    %1583 = vmatpush1.bf16.msra.mxu0 %v1461
    %1584 = vmatprep.subr.bf16.mxu0 %v1459
    %1585 = vmatpush1.bf16.msra.mxu0 %v1458
    %1586 = vmatprep.subr.bf16.mxu0 %v1456
    %1587 = vmatpush1.bf16.msra.mxu0 %v1455
    %1588 = vmatprep.subr.bf16.mxu0 %v1453
    %1589 = vmatpush1.bf16.msra.mxu0 %v1452
    %1590 = vmatprep.subr.bf16.mxu0 %v1450
    %1591 = vmatpush1.bf16.msra.mxu0 %v1449
    %1592 = vmatprep.subr.bf16.mxu0 %v1447
    %1593 = vmatpush1.bf16.msra.mxu0 %v1446
    %1594 = vmatprep.subr.bf16.mxu0 %v1444
    %1595 = vmatpush1.bf16.msra.mxu0 %v1443
    %1596 = vmatprep.subr.bf16.mxu0 0
    %1597 = vmatpush2.bf16.msra.mxu0 0
    %1598 = vmatprep.subr.bf16.mxu0 0
    %1599 = vmatpush2.bf16.msra.mxu0 0
    %1600 = vmatprep.subr.bf16.mxu0 0
    %1601 = vmatpush2.bf16.msra.mxu0 0
    %1602 = vmatprep.subr.bf16.mxu0 0
    %1603 = vmatpush2.bf16.msra.mxu0 0
    %1604 = vmatprep.subr.bf16.mxu0 0
    %1605 = vmatpush2.bf16.msra.mxu0 0
    %1606 = vmatprep.subr.bf16.mxu0 0
    %1607 = vmatpush2.bf16.msra.mxu0 0
    %1608 = vmatprep.subr.bf16.mxu0 0
    %1609 = vmatpush2.bf16.msra.mxu0 0
    %1610 = vmatprep.subr.bf16.mxu0 0
    %1611 = vmatpush2.bf16.msra.mxu0 0
    %1612 = vmatprep.mubr.bf16.mxu0 0
    %1613 = vmatmul.mubr.bf16.gmra.mxu0 %v1041
    %v1614 = vpop.f32.mrf.mxu0
    %v1615 = vadd.f32 %v1574, %v1614
    %v1616 = vpop.f32.mrf.mxu0
    %v1617 = vadd.f32 %v1576, %v1616
    %v1618 = vpop.f32.mrf.mxu0
    %v1619 = vpop.f32.mrf.mxu0
    %1620 = vdwg.mxu0
    %1621 = vmatprep.subr.bf16.mxu0 0
    %1622 = vmatpush1.bf16.msra.mxu0 %v1418
    %1623 = vmatprep.subr.bf16.mxu0 0
    %1624 = vmatpush1.bf16.msra.mxu0 %v1415
    %1625 = vmatprep.subr.bf16.mxu0 0
    %1626 = vmatpush1.bf16.msra.mxu0 %v1412
    %1627 = vmatprep.subr.bf16.mxu0 0
    %1628 = vmatpush1.bf16.msra.mxu0 %v1409
    %1629 = vmatprep.subr.bf16.mxu0 0
    %1630 = vmatpush1.bf16.msra.mxu0 %v1406
    %1631 = vmatprep.subr.bf16.mxu0 0
    %1632 = vmatpush1.bf16.msra.mxu0 %v1403
    %1633 = vmatprep.subr.bf16.mxu0 0
    %1634 = vmatpush1.bf16.msra.mxu0 %v1400
    %1635 = vmatprep.subr.bf16.mxu0 0
    %1636 = vmatpush1.bf16.msra.mxu0 %v1397
    %1637 = vmatprep.subr.bf16.mxu0 0
    %1638 = vmatpush2.bf16.msra.mxu0 %v1442
    %1639 = vmatprep.subr.bf16.mxu0 0
    %1640 = vmatpush2.bf16.msra.mxu0 %v1439
    %1641 = vmatprep.subr.bf16.mxu0 0
    %1642 = vmatpush2.bf16.msra.mxu0 %v1436
    %1643 = vmatprep.subr.bf16.mxu0 0
    %1644 = vmatpush2.bf16.msra.mxu0 %v1433
    %1645 = vmatprep.subr.bf16.mxu0 0
    %1646 = vmatpush2.bf16.msra.mxu0 %v1430
    %1647 = vmatprep.subr.bf16.mxu0 0
    %1648 = vmatpush2.bf16.msra.mxu0 %v1427
    %1649 = vmatprep.subr.bf16.mxu0 0
    %1650 = vmatpush2.bf16.msra.mxu0 %v1424
    %1651 = vmatprep.subr.bf16.mxu0 0
    %1652 = vmatpush2.bf16.msra.mxu0 %v1421
    %1653 = vmatprep.mubr.bf16.mxu0 %v1040
    %1654 = vmatmul.mubr.bf16.gmra.mxu0 %v1039
    %v1655 = vpop.f32.mrf.mxu0
    %v1656 = vadd.f32 %v1151, %v1655
    %v1657 = vpop.f32.mrf.mxu0
    %v1658 = vpop.f32.mrf.mxu0
    %v1659 = vpop.f32.mrf.mxu0
    %1660 = vdwg.mxu0
    %1661 = vmatprep.subr.bf16.mxu0 0
    %1662 = vmatpush1.bf16.msra.mxu0 %v1466
    %1663 = vmatprep.subr.bf16.mxu0 0
    %1664 = vmatpush1.bf16.msra.mxu0 %v1463
    %1665 = vmatprep.subr.bf16.mxu0 0
    %1666 = vmatpush1.bf16.msra.mxu0 %v1460
    %1667 = vmatprep.subr.bf16.mxu0 0
    %1668 = vmatpush1.bf16.msra.mxu0 %v1457
    %1669 = vmatprep.subr.bf16.mxu0 0
    %1670 = vmatpush1.bf16.msra.mxu0 %v1454
    %1671 = vmatprep.subr.bf16.mxu0 0
    %1672 = vmatpush1.bf16.msra.mxu0 %v1451
    %1673 = vmatprep.subr.bf16.mxu0 0
    %1674 = vmatpush1.bf16.msra.mxu0 %v1448
    %1675 = vmatprep.subr.bf16.mxu0 0
    %1676 = vmatpush1.bf16.msra.mxu0 %v1445
    %1677 = vmatprep.subr.bf16.mxu0 0
    %1678 = vmatpush2.bf16.msra.mxu0 0
    %1679 = vmatprep.subr.bf16.mxu0 0
    %1680 = vmatpush2.bf16.msra.mxu0 0
    %1681 = vmatprep.subr.bf16.mxu0 0
    %1682 = vmatpush2.bf16.msra.mxu0 0
    %1683 = vmatprep.subr.bf16.mxu0 0
    %1684 = vmatpush2.bf16.msra.mxu0 0
    %1685 = vmatprep.subr.bf16.mxu0 0
    %1686 = vmatpush2.bf16.msra.mxu0 0
    %1687 = vmatprep.subr.bf16.mxu0 0
    %1688 = vmatpush2.bf16.msra.mxu0 0
    %1689 = vmatprep.subr.bf16.mxu0 0
    %1690 = vmatpush2.bf16.msra.mxu0 0
    %1691 = vmatprep.subr.bf16.mxu0 0
    %1692 = vmatpush2.bf16.msra.mxu0 0
    %1693 = vmatprep.mubr.bf16.mxu0 0
    %1694 = vmatmul.mubr.bf16.gmra.mxu0 %v1041
    %v1695 = vpop.f32.mrf.mxu0
    %v1696 = vadd.f32 %v1656, %v1695
    %v1697 = vpop.f32.mrf.mxu0
    %v1698 = vpop.f32.mrf.mxu0
    %v1699 = vpop.f32.mrf.mxu0
    %1700 = vdwg.mxu0
    %v1701 = vmax.f32 %v1615, 0.0
    %v1702 = vmax.f32 %v1617, 0.0
    %v1703 = vmax.f32 %v1696, 0.0
    %v1704 = vpack.c.bf16 %v1701, %v1701
    %v1705 = vpack.c.bf16 %v1702, %v1702
    %v1706 = vpack.c.bf16 %v1703, %v1703
    %v1707 = vld [vmem:[#allocation11] sm:$0xf]
    %v1708 = vld [vmem:[#allocation11 + $0x4] sm:$0xf]
    %v1709 = vld [vmem:[#allocation11 + $0x8] sm:$0xf]
    %v1710 = vld [vmem:[#allocation11 + $0xc] sm:$0xf]
    %v1711 = vld [vmem:[#allocation11 + $0x10] sm:$0xf]
    %v1712 = vld [vmem:[#allocation11 + $0x14] sm:$0xf]
    %v1713 = vld [vmem:[#allocation11 + $0x18] sm:$0xf]
    %v1714 = vld [vmem:[#allocation11 + $0x1c] sm:$0xf]
    %v1715 = vld [vmem:[#allocation11 + $0x20] sm:$0xf]
    %v1716 = vld [vmem:[#allocation11 + $0x24] sm:$0xf]
    %v1717 = vld [vmem:[#allocation11 + $0x28] sm:$0xf]
    %v1718 = vld [vmem:[#allocation11 + $0x2c] sm:$0xf]
    %v1719 = vld [vmem:[#allocation11 + $0x30] sm:$0xf]
    %v1720 = vld [vmem:[#allocation11 + $0x34] sm:$0xf]
    %v1721 = vld [vmem:[#allocation11 + $0x38] sm:$0xf]
    %v1722 = vld [vmem:[#allocation11 + $0x3c] sm:$0xf]
    %v1723 = vld [vmem:[#allocation11 + $0x40] sm:$0xf]
    %v1724 = vld [vmem:[#allocation11 + $0x44] sm:$0xf]
    %v1725 = vld [vmem:[#allocation11 + $0x48] sm:$0xf]
    %v1726 = vld [vmem:[#allocation11 + $0x4c] sm:$0xf]
    %v1727 = vld [vmem:[#allocation11 + $0x50] sm:$0xf]
    %v1728 = vld [vmem:[#allocation11 + $0x54] sm:$0xf]
    %v1729 = vld [vmem:[#allocation11 + $0x58] sm:$0xf]
    %v1730 = vld [vmem:[#allocation11 + $0x5c] sm:$0xf]
    %v1731 = vld [vmem:[#allocation11 + $0x60] sm:$0xf]
    %v1732 = vld [vmem:[#allocation11 + $0x64] sm:$0xf]
    %v1733 = vld [vmem:[#allocation11 + $0x68] sm:$0xf]
    %v1734 = vld [vmem:[#allocation11 + $0x6c] sm:$0xf]
    %v1735 = vld [vmem:[#allocation11 + $0x70] sm:$0xf]
    %v1736 = vld [vmem:[#allocation11 + $0x74] sm:$0xf]
    %v1737 = vld [vmem:[#allocation11 + $0x78] sm:$0xf]
    %v1738 = vld [vmem:[#allocation11 + $0x7c] sm:$0xf]
    %v1739 = vld [vmem:[#allocation11 + $0x80] sm:$0xf]
    %v1740 = vld [vmem:[#allocation11 + $0x84] sm:$0xf]
    %v1741 = vld [vmem:[#allocation11 + $0x88] sm:$0xf]
    %v1742 = vld [vmem:[#allocation11 + $0x8c] sm:$0xf]
    %v1743 = vld [vmem:[#allocation11 + $0x90] sm:$0xf]
    %v1744 = vld [vmem:[#allocation11 + $0x94] sm:$0xf]
    %v1745 = vld [vmem:[#allocation11 + $0x98] sm:$0xf]
    %v1746 = vld [vmem:[#allocation11 + $0x9c] sm:$0xf]
    %v1747 = vld [vmem:[#allocation11 + $0xa0] sm:$0xf]
    %v1748 = vld [vmem:[#allocation11 + $0xa4] sm:$0xf]
    %v1749 = vld [vmem:[#allocation11 + $0xa8] sm:$0xf]
    %v1750 = vld [vmem:[#allocation11 + $0xac] sm:$0xf]
    %v1751 = vld [vmem:[#allocation11 + $0xb0] sm:$0xf]
    %v1752 = vld [vmem:[#allocation11 + $0xb4] sm:$0xf]
    %v1753 = vld [vmem:[#allocation11 + $0xb8] sm:$0xf]
    %v1754 = vld [vmem:[#allocation11 + $0xbc] sm:$0xf]
    %v1755 = vld [vmem:[%s8] sm:$0x1]
    %v1757 = vlaneseq
    %v1758 = vshrl.u32 %v1757, 7
    %v1759 = vsub.s32 0, %v1758
    %v1760 = vrot.slane %v1755, %v1759
    %v1810 = vunpack.c.l.b16 %v1707
    %v1811 = vunpack.c.l.b16 %v1708
    %v1812 = vunpack.c.l.b16 %v1709
    %v1813 = vunpack.c.l.b16 %v1710
    %v1814 = vunpack.c.l.b16 %v1711
    %v1815 = vunpack.c.l.b16 %v1712
    %v1816 = vunpack.c.l.b16 %v1713
    %v1817 = vunpack.c.l.b16 %v1714
    %v1818 = vunpack.c.l.b16 %v1715
    %v1819 = vunpack.c.l.b16 %v1716
    %v1820 = vunpack.c.l.b16 %v1717
    %v1821 = vunpack.c.l.b16 %v1718
    %v1822 = vunpack.c.l.b16 %v1719
    %v1823 = vunpack.c.l.b16 %v1720
    %v1824 = vunpack.c.l.b16 %v1721
    %v1825 = vunpack.c.l.b16 %v1722
    %v1826 = vunpack.c.l.b16 %v1723
    %v1827 = vunpack.c.l.b16 %v1724
    %v1828 = vunpack.c.l.b16 %v1725
    %v1829 = vunpack.c.l.b16 %v1726
    %v1830 = vunpack.c.l.b16 %v1727
    %v1831 = vunpack.c.l.b16 %v1728
    %v1832 = vunpack.c.l.b16 %v1729
    %v1833 = vunpack.c.l.b16 %v1730
    %v1834 = vunpack.c.l.b16 %v1731
    %v1835 = vunpack.c.l.b16 %v1732
    %v1836 = vunpack.c.l.b16 %v1733
    %v1837 = vunpack.c.l.b16 %v1734
    %v1838 = vunpack.c.l.b16 %v1735
    %v1839 = vunpack.c.l.b16 %v1736
    %v1840 = vunpack.c.l.b16 %v1737
    %v1841 = vunpack.c.l.b16 %v1738
    %v1842 = vunpack.c.l.b16 %v1739
    %v1843 = vunpack.c.l.b16 %v1740
    %v1844 = vunpack.c.l.b16 %v1741
    %v1845 = vunpack.c.l.b16 %v1742
    %v1846 = vunpack.c.l.b16 %v1743
    %v1847 = vunpack.c.l.b16 %v1744
    %v1848 = vunpack.c.l.b16 %v1745
    %v1849 = vunpack.c.l.b16 %v1746
    %v1850 = vunpack.c.l.b16 %v1747
    %v1851 = vunpack.c.l.b16 %v1748
    %v1852 = vunpack.c.l.b16 %v1749
    %v1853 = vunpack.c.l.b16 %v1750
    %v1854 = vunpack.c.l.b16 %v1751
    %v1855 = vunpack.c.l.b16 %v1752
    %v1856 = vunpack.c.l.b16 %v1753
    %v1857 = vunpack.c.l.b16 %v1754
    %v1858 = vpack.c.b16 %v1811, %v1810
    %v1859 = vpack.c.b16 %v1813, %v1812
    %v1860 = vpack.c.b16 %v1815, %v1814
    %v1861 = vpack.c.b16 %v1817, %v1816
    %v1862 = vpack.c.b16 %v1819, %v1818
    %v1863 = vpack.c.b16 %v1821, %v1820
    %v1864 = vpack.c.b16 %v1823, %v1822
    %v1865 = vpack.c.b16 %v1825, %v1824
    %v1866 = vpack.c.b16 %v1827, %v1826
    %v1867 = vpack.c.b16 %v1829, %v1828
    %v1868 = vpack.c.b16 %v1831, %v1830
    %v1869 = vpack.c.b16 %v1833, %v1832
    %v1870 = vpack.c.b16 %v1835, %v1834
    %v1871 = vpack.c.b16 %v1837, %v1836
    %v1872 = vpack.c.b16 %v1839, %v1838
    %v1873 = vpack.c.b16 %v1841, %v1840
    %v1874 = vpack.c.b16 %v1843, %v1842
    %v1875 = vpack.c.b16 %v1845, %v1844
    %v1876 = vpack.c.b16 %v1847, %v1846
    %v1877 = vpack.c.b16 %v1849, %v1848
    %v1878 = vpack.c.b16 %v1851, %v1850
    %v1879 = vpack.c.b16 %v1853, %v1852
    %v1880 = vpack.c.b16 %v1855, %v1854
    %v1881 = vpack.c.b16 %v1857, %v1856
    %1906 = vmatprep.subr.bf16.mxu0 0
    %1907 = vmatpush1.bf16.msra.mxu0 %v1865
    %1908 = vmatprep.subr.bf16.mxu0 0
    %1909 = vmatpush1.bf16.msra.mxu0 %v1864
    %1910 = vmatprep.subr.bf16.mxu0 0
    %1911 = vmatpush1.bf16.msra.mxu0 %v1863
    %1912 = vmatprep.subr.bf16.mxu0 0
    %1913 = vmatpush1.bf16.msra.mxu0 %v1862
    %1914 = vmatprep.subr.bf16.mxu0 0
    %1915 = vmatpush1.bf16.msra.mxu0 %v1861
    %1916 = vmatprep.subr.bf16.mxu0 0
    %1917 = vmatpush1.bf16.msra.mxu0 %v1860
    %1918 = vmatprep.subr.bf16.mxu0 0
    %1919 = vmatpush1.bf16.msra.mxu0 %v1859
    %1920 = vmatprep.subr.bf16.mxu0 0
    %1921 = vmatpush1.bf16.msra.mxu0 %v1858
    %1922 = vmatprep.subr.bf16.mxu0 0
    %1923 = vmatpush2.bf16.msra.mxu0 %v1873
    %1924 = vmatprep.subr.bf16.mxu0 0
    %1925 = vmatpush2.bf16.msra.mxu0 %v1872
    %1926 = vmatprep.subr.bf16.mxu0 0
    %1927 = vmatpush2.bf16.msra.mxu0 %v1871
    %1928 = vmatprep.subr.bf16.mxu0 0
    %1929 = vmatpush2.bf16.msra.mxu0 %v1870
    %1930 = vmatprep.subr.bf16.mxu0 0
    %1931 = vmatpush2.bf16.msra.mxu0 %v1869
    %1932 = vmatprep.subr.bf16.mxu0 0
    %1933 = vmatpush2.bf16.msra.mxu0 %v1868
    %1934 = vmatprep.subr.bf16.mxu0 0
    %1935 = vmatpush2.bf16.msra.mxu0 %v1867
    %1936 = vmatprep.subr.bf16.mxu0 0
    %1937 = vmatpush2.bf16.msra.mxu0 %v1866
    %1938 = vmatprep.mubr.bf16.mxu0 %v1705
    %1939 = vmatmul.mubr.bf16.gmra.mxu0 %v1704
    %v1940 = vpop.f32.mrf.mxu0
    %v1941 = vadd.f32 %v1760, %v1940
    %v1942 = vpop.f32.mrf.mxu0
    %v1943 = vpop.f32.mrf.mxu0
    %v1944 = vpop.f32.mrf.mxu0
    %1945 = vdwg.mxu0
    %1946 = vmatprep.subr.bf16.mxu0 0
    %1947 = vmatpush1.bf16.msra.mxu0 %v1881
    %1948 = vmatprep.subr.bf16.mxu0 0
    %1949 = vmatpush1.bf16.msra.mxu0 %v1880
    %1950 = vmatprep.subr.bf16.mxu0 0
    %1951 = vmatpush1.bf16.msra.mxu0 %v1879
    %1952 = vmatprep.subr.bf16.mxu0 0
    %1953 = vmatpush1.bf16.msra.mxu0 %v1878
    %1954 = vmatprep.subr.bf16.mxu0 0
    %1955 = vmatpush1.bf16.msra.mxu0 %v1877
    %1956 = vmatprep.subr.bf16.mxu0 0
    %1957 = vmatpush1.bf16.msra.mxu0 %v1876
    %1958 = vmatprep.subr.bf16.mxu0 0
    %1959 = vmatpush1.bf16.msra.mxu0 %v1875
    %1960 = vmatprep.subr.bf16.mxu0 0
    %1961 = vmatpush1.bf16.msra.mxu0 %v1874
    %1962 = vmatprep.subr.bf16.mxu0 0
    %1963 = vmatpush2.bf16.msra.mxu0 0
    %1964 = vmatprep.subr.bf16.mxu0 0
    %1965 = vmatpush2.bf16.msra.mxu0 0
    %1966 = vmatprep.subr.bf16.mxu0 0
    %1967 = vmatpush2.bf16.msra.mxu0 0
    %1968 = vmatprep.subr.bf16.mxu0 0
    %1969 = vmatpush2.bf16.msra.mxu0 0
    %1970 = vmatprep.subr.bf16.mxu0 0
    %1971 = vmatpush2.bf16.msra.mxu0 0
    %1972 = vmatprep.subr.bf16.mxu0 0
    %1973 = vmatpush2.bf16.msra.mxu0 0
    %1974 = vmatprep.subr.bf16.mxu0 0
    %1975 = vmatpush2.bf16.msra.mxu0 0
    %1976 = vmatprep.subr.bf16.mxu0 0
    %1977 = vmatpush2.bf16.msra.mxu0 0
    %1978 = vmatprep.mubr.bf16.mxu0 0
    %1979 = vmatmul.mubr.bf16.gmra.mxu0 %v1706
    %v1980 = vpop.f32.mrf.mxu0
    %v1981 = vadd.f32 %v1941, %v1980
    %v1982 = vpop.f32.mrf.mxu0
    %v1983 = vpop.f32.mrf.mxu0
    %v1984 = vpop.f32.mrf.mxu0
    %1985 = vdwg.mxu0
    %1986 = vst.msk [vmem:[#allocation12] sm:$0xff] %vm102, %v1981
    // Predicated region
    $region58: #{fullcon_forward.1} parent=1 // pred_check
      _
    $region59: #{fullcon_forward.1} parent=1 // pred_check_branch
      %1988 = sbr.rel (0) target = $region61
    $region60: #{fullcon_forward.1} parent=1 // pred_region
      %s1990 = ssub.s32 128, 128
      %1991 = vsyncadd [#allocation5], %s1990
      %s1993 = sshll.u32 [#allocation12], 4
      %s1994 = int_to_ptr.vmem [resolvable:$true] %s1993
      %1996 = dma.vmem_to_hbm [thread:$0]  %s1994, 128, %s9, [#allocation5]
    $region61: #{fullcon_forward.1} parent=1 // pred_fallthru
      _
    // Predicated region
    $region62: #{fullcon_forward.1} parent=1 // pred_check
      _
    $region63: #{fullcon_forward.1} parent=1 // pred_check_branch
      %1998 = sbr.rel (0) target = $region65
    $region64: #{fullcon_forward.1} parent=1 // pred_region
      %1999 = dma.done [#allocation5], 128
    $region65: #{fullcon_forward.1} parent=1 // pred_fallthru
      _
    %2000 = vsyncpa [#allocation4], 1
    %2001 = vsyncpa [#allocation7], 1
    %2002 = vsyncpa [#allocation10], 1
    %2003 = vsyncpa [#allocation5], 1

</llo_original>
